<compile_context>
chip_gen: v6e
topology: v6e:2x2x1
jax: 0.10.0
libtpu: 0.0.40
codegen_flags: <defaults>
</compile_context>

<pallas_src>
import jax
import jax.numpy as jnp
from jax.experimental import pallas as pl
from jax.experimental.pallas import tpu as pltpu

# ----------------------------- configuration --------------------------------
D_IN, D_OUT = 1, 1                   # feature degrees
C_IN, C_OUT = 4, 4                   # channels
N_DIMS_EDGE = 8                      # edge-embedding dims
MID = 32                             # RadialFunc hidden width
N_FREQS = 2 * min(D_IN, D_OUT) + 1   # 3
DI_E = 2 * D_IN + 1                  # 3
DO_E = 2 * D_OUT + 1                 # 3
BS = 128                             # number of edges (batch)
DE1 = N_DIMS_EDGE + 1                # 9
NOUT = C_OUT * C_IN * N_FREQS        # 48  RadialFunc output width, layout (co,ci,f)
K = C_OUT * C_IN                     # 16
M = DO_E * DI_E                      # 9
KM = K * M                           # 144 lane-dense kernel-output width, col = k*M + m
MF = M * N_FREQS                     # 27  lane-dense basis-input width,  col = m*NF + f

# One grid step covers the whole batch at this size.  For production edge
# counts (1e4-1e5 edges) keep this edge-parallel grid and raise TB to 512-2048
# (fits comfortably in VMEM on all gens, incl. v7x's 64 MiB) so megacore splits
# the edge axis.
TB = min(BS, 128)
assert BS % TB == 0


# ------------------------------ Pallas kernel --------------------------------
def pairwise_conv_kernel(x_ref, basis_ref, w1_ref, b1_ref, w2_ref, b2_ref,
                         w3e_ref, b3e_ref, te_ref, o_ref):
    """Fused RadialFunc MLP + per-edge contraction against the equivariant basis.

    Everything is a lane-dense 2-D slab (rows = edges); the tiny frequency
    contraction (n_freqs = 3) is statically unrolled.
      r_f[:, k*M + m] = radial[:, k, f]   (via host-expanded w3e/b3e)
      b_f[:, k*M + m] = basis [:, m, f]   (via exact one-hot matmul with te[f])
      out[:, k*M + m] = sum_f r_f * b_f   == torch.bmm(radial, basis^T) flattened
    """
    x = x_ref[...]                                                    # (TB, 9)
    # RadialFunc: Linear -> BN(eval, folded) -> ReLU -> Linear -> BN -> ReLU
    h = jnp.maximum(
        jnp.dot(x, w1_ref[...], preferred_element_type=jnp.float32) + b1_ref[...], 0.0)
    h = jnp.maximum(
        jnp.dot(h, w2_ref[...], preferred_element_type=jnp.float32) + b2_ref[...], 0.0)

    bas = basis_ref[...]                                              # (TB, 27)
    tb = x.shape[0]
    acc = jnp.zeros((tb, KM), jnp.float32)
    for f in range(N_FREQS):                                          # static unroll (3)
        # Final Linear of RadialFunc, pre-expanded to the output column layout.
        r_f = jnp.dot(h, w3e_ref[f], preferred_element_type=jnp.float32) + b3e_ref[f]
        # Exact gather of the basis into the same column layout (one-hot matmul).
        b_f = jnp.dot(bas, te_ref[f], preferred_element_type=jnp.float32)
        acc = acc + r_f * b_f
    o_ref[...] = acc                                                  # (TB, 144) dense store


# ------------------------- host-side parameter prep --------------------------
def fold_params(params):
    """Fold eval-mode BN into the Linears and pre-expand the last Linear plus a
    one-hot basis-gather matrix into the kernel's lane-dense layouts.

    Exact reparameterization, done host-side (cache it in production).
    """
    w1, b1, s1, t1, w2, b2, s2, t2, w3, b3 = params
    # BN(eval): y = (x @ W + b) * s + t  ==  x @ (W*s) + (b*s + t)
    w1f, b1f = w1 * s1, b1 * s1 + t1
    w2f, b2f = w2 * s2, b2 * s2 + t2

    # w3e[f, :, k*M + m] = w3[:, k*N_FREQS + f]   (same for the bias)
    k_of_col = jnp.arange(KM) // M                                          # (144,)
    rad_src = k_of_col[None, :] * N_FREQS + jnp.arange(N_FREQS)[:, None]    # (NF, 144)
    w3e = jnp.transpose(w3[:, rad_src], (1, 0, 2))                          # (NF, MID, 144)
    b3e = jnp.transpose(b3[:, rad_src], (1, 0, 2))                          # (NF, 1, 144)

    # te[f, cb, k*M + m] = 1  iff  cb == m*N_FREQS + f   (one-hot gather matrix)
    m_of_col = jnp.arange(KM) % M
    bas_src = m_of_col[None, :] * N_FREQS + jnp.arange(N_FREQS)[:, None]    # (NF, 144)
    te = (jnp.arange(MF)[None, :, None] == bas_src[:, None, :]).astype(jnp.float32)
    return w1f, b1f, w2f, b2f, w3e, b3e, te


# ----------------------------- forward wrapper --------------------------------
def pairwise_conv_forward(inputs, basis_dict, params):
    """Mirrors PairwiseConv.forward (BatchNorm in eval mode)."""
    bs = inputs.shape[0]
    w1f, b1f, w2f, b2f, w3e, b3e, te = fold_params(params)
    basis = basis_dict[(D_IN, D_OUT)]
    basis_flat = basis.reshape(bs, MF)            # contiguous view, col = m*NF + f

    const2 = lambda i: (0, 0)
    const3 = lambda i: (0, 0, 0)
    out_flat = pl.pallas_call(
        pairwise_conv_kernel,
        out_shape=jax.ShapeDtypeStruct((bs, KM), jnp.float32),
        grid_spec=pltpu.PrefetchScalarGridSpec(
            num_scalar_prefetch=0,
            grid=(bs // TB,),
            in_specs=[
                pl.BlockSpec((TB, DE1), lambda i: (i, 0)),
                pl.BlockSpec((TB, MF), lambda i: (i, 0)),
                pl.BlockSpec((DE1, MID), const2),
                pl.BlockSpec((1, MID), const2),
                pl.BlockSpec((MID, MID), const2),
                pl.BlockSpec((1, MID), const2),
                pl.BlockSpec((N_FREQS, MID, KM), const3),
                pl.BlockSpec((N_FREQS, 1, KM), const3),
                pl.BlockSpec((N_FREQS, MF, KM), const3),
            ],
            out_specs=pl.BlockSpec((TB, KM), lambda i: (i, 0)),
        ),
        compiler_params=pltpu.CompilerParams(dimension_semantics=("parallel",)),
    )(inputs, basis_flat, w1f, b1f, w2f, b2f, w3e, b3e, te)

    # .view(-1, co, ci, do_e, di_e).permute(0,1,3,2,4).view(-1, co*do_e, ci*di_e)
    # (layout-only XLA transpose on a tiny tensor; cheaper than a 12-lane store)
    out = (out_flat.reshape(bs, C_OUT, C_IN, DO_E, DI_E)
                   .transpose(0, 1, 3, 2, 4)
                   .reshape(bs, C_OUT * DO_E, C_IN * DI_E))
    return out


# --------------------------- reference (plain JAX) ---------------------------
def reference_forward(inputs, basis, params):
    w1, b1, s1, t1, w2, b2, s2, t2, w3, b3 = params
    h = jnp.maximum((inputs @ w1 + b1) * s1 + t1, 0.0)
    h = jnp.maximum((h @ w2 + b2) * s2 + t2, 0.0)
    r = h @ w3 + b3
    radial = r.reshape(BS, K, N_FREQS)
    basis_v = basis.reshape(BS, M, N_FREQS).transpose(0, 2, 1)
    out = jnp.einsum('bkf,bfm->bkm', radial, basis_v)
    return (out.reshape(BS, C_OUT, C_IN, DO_E, DI_E)
               .transpose(0, 1, 3, 2, 4)
               .reshape(BS, C_OUT * DO_E, C_IN * DI_E))


# ------------------------------ parameter init -------------------------------
def init_params(key):
    ks = jax.random.split(key, 10)

    def kaiming(k, fan_in, shape):
        return jax.random.normal(k, shape, jnp.float32) * jnp.sqrt(2.0 / fan_in)

    # Linear weights stored as (in, out) so the kernel computes x @ W directly
    # (equivalent to PyTorch's x @ W.T with W of shape (out, in)).
    w1 = kaiming(ks[0], DE1, (DE1, MID))
    b1 = jax.random.uniform(ks[1], (1, MID), jnp.float32, -0.1, 0.1)
    w2 = kaiming(ks[2], MID, (MID, MID))
    b2 = jax.random.uniform(ks[3], (1, MID), jnp.float32, -0.1, 0.1)
    w3 = kaiming(ks[4], MID, (MID, NOUT))     # output flat layout (C_out, C_in, n_freqs)
    b3 = jax.random.uniform(ks[5], (1, NOUT), jnp.float32, -0.1, 0.1)
    # BatchNorm1d (eval mode): running_mean=0, running_var=1, random affine.
    eps = 1e-5
    g1 = 1.0 + 0.1 * jax.random.normal(ks[6], (1, MID), jnp.float32)
    be1 = 0.1 * jax.random.normal(ks[7], (1, MID), jnp.float32)
    g2 = 1.0 + 0.1 * jax.random.normal(ks[8], (1, MID), jnp.float32)
    be2 = 0.1 * jax.random.normal(ks[9], (1, MID), jnp.float32)
    rm, rv = 0.0, 1.0
    s1 = g1 / jnp.sqrt(rv + eps)
    t1 = be1 - rm * s1
    s2 = g2 / jnp.sqrt(rv + eps)
    t2 = be2 - rm * s2
    return (w1, b1, s1, t1, w2, b2, s2, t2, w3, b3)


# ----------------------------------- main ------------------------------------
if __name__ == "__main__":
    root = jax.random.PRNGKey(0)
    k_in, k_basis, k_params = jax.random.split(root, 3)

    inputs = jax.random.normal(k_in, (BS, N_DIMS_EDGE + 1), jnp.float32)
    # basis_dict[(d_in, d_out)]: (BS, 1, do_e, 1, di_e, n_freqs), as produced by
    # the SE(3)-Transformer basis computation.
    basis = jax.random.normal(k_basis, (BS, 1, DO_E, 1, DI_E, N_FREQS), jnp.float32)
    basis_dict = {(D_IN, D_OUT): basis}
    params = init_params(k_params)

    out = pairwise_conv_forward(inputs, basis_dict, params)
    out = jax.block_until_ready(out)

    assert out.shape == (BS, C_OUT * DO_E, C_IN * DI_E), out.shape
    ref = reference_forward(inputs, basis, params)
    max_err = float(jnp.max(jnp.abs(out - ref)))
    if max_err > 1e-4:
        raise AssertionError(f"mismatch vs reference, max abs err = {max_err}")

    print("KERNEL_OK")
</pallas_src>

<mosaic_0001>
module attributes {stable_mosaic.version = 11 : i64} {
  func.func @pairwise_conv_kernel(%arg0: i32, %arg1: memref<128x9xf32, #tpu.memory_space<vmem>>, %arg2: memref<128x27xf32, #tpu.memory_space<vmem>>, %arg3: memref<9x32xf32, #tpu.memory_space<vmem>>, %arg4: memref<1x32xf32, #tpu.memory_space<vmem>>, %arg5: memref<32x32xf32, #tpu.memory_space<vmem>>, %arg6: memref<1x32xf32, #tpu.memory_space<vmem>>, %arg7: memref<3x32x144xf32, #tpu.memory_space<vmem>>, %arg8: memref<3x1x144xf32, #tpu.memory_space<vmem>>, %arg9: memref<3x27x144xf32, #tpu.memory_space<vmem>>, %arg10: memref<128x144xf32, #tpu.memory_space<vmem>>) attributes {dimension_semantics = [#tpu.dimension_semantics<parallel>], iteration_bounds = array<i64: 1>, scalar_prefetch = 0 : i64, scratch_operands = 0 : i64, tpu.core_type = #tpu.core_type<tc>, window_params = [{transform_indices = @transform_0, window_bounds = array<i64: 128, 9>}, {transform_indices = @transform_1, window_bounds = array<i64: 128, 27>}, {pipeline_mode = #tpu.pipeline_mode<synchronous>, transform_indices = @transform_2, window_bounds = array<i64: 9, 32>}, {pipeline_mode = #tpu.pipeline_mode<synchronous>, transform_indices = @transform_3, window_bounds = array<i64: 1, 32>}, {pipeline_mode = #tpu.pipeline_mode<synchronous>, transform_indices = @transform_4, window_bounds = array<i64: 32, 32>}, {pipeline_mode = #tpu.pipeline_mode<synchronous>, transform_indices = @transform_5, window_bounds = array<i64: 1, 32>}, {pipeline_mode = #tpu.pipeline_mode<synchronous>, transform_indices = @transform_6, window_bounds = array<i64: 3, 32, 144>}, {pipeline_mode = #tpu.pipeline_mode<synchronous>, transform_indices = @transform_7, window_bounds = array<i64: 3, 1, 144>}, {pipeline_mode = #tpu.pipeline_mode<synchronous>, transform_indices = @transform_8, window_bounds = array<i64: 3, 27, 144>}, {transform_indices = @transform_9, window_bounds = array<i64: 128, 144>}]} {
    %c0 = arith.constant 0 : index
    %c0_0 = arith.constant 0 : index
    %0 = vector.load %arg1[%c0, %c0_0] : memref<128x9xf32, #tpu.memory_space<vmem>>, vector<128x9xf32>
    %c0_1 = arith.constant 0 : index
    %c0_2 = arith.constant 0 : index
    %1 = vector.load %arg3[%c0_1, %c0_2] : memref<9x32xf32, #tpu.memory_space<vmem>>, vector<9x32xf32>
    %cst = arith.constant dense<0.000000e+00> : vector<128x32xf32>
    %2 = tpu.matmul %0, %1, %cst {dimension_numbers = #tpu.dot_dimension_numbers<[1], [0], [0], [1], [0, 0, 1, 1], [], []>} : vector<128x9xf32>, vector<9x32xf32>, vector<128x32xf32> -> vector<128x32xf32>
    %c0_3 = arith.constant 0 : index
    %c0_4 = arith.constant 0 : index
    %3 = vector.load %arg4[%c0_3, %c0_4] : memref<1x32xf32, #tpu.memory_space<vmem>>, vector<1x32xf32>
    %4 = vector.broadcast %3 : vector<1x32xf32> to vector<128x32xf32>
    %5 = arith.addf %2, %4 : vector<128x32xf32>
    %cst_5 = arith.constant 0.000000e+00 : f32
    %6 = vector.broadcast %cst_5 : f32 to vector<128x32xf32>
    %7 = arith.maximumf %5, %6 : vector<128x32xf32>
    %c0_6 = arith.constant 0 : index
    %c0_7 = arith.constant 0 : index
    %8 = vector.load %arg5[%c0_6, %c0_7] : memref<32x32xf32, #tpu.memory_space<vmem>>, vector<32x32xf32>
    %cst_8 = arith.constant dense<0.000000e+00> : vector<128x32xf32>
    %9 = tpu.matmul %7, %8, %cst_8 {dimension_numbers = #tpu.dot_dimension_numbers<[1], [0], [0], [1], [0, 0, 1, 1], [], []>} : vector<128x32xf32>, vector<32x32xf32>, vector<128x32xf32> -> vector<128x32xf32>
    %c0_9 = arith.constant 0 : index
    %c0_10 = arith.constant 0 : index
    %10 = vector.load %arg6[%c0_9, %c0_10] : memref<1x32xf32, #tpu.memory_space<vmem>>, vector<1x32xf32>
    %11 = vector.broadcast %10 : vector<1x32xf32> to vector<128x32xf32>
    %12 = arith.addf %9, %11 : vector<128x32xf32>
    %cst_11 = arith.constant 0.000000e+00 : f32
    %13 = vector.broadcast %cst_11 : f32 to vector<128x32xf32>
    %14 = arith.maximumf %12, %13 : vector<128x32xf32>
    %c0_12 = arith.constant 0 : index
    %c0_13 = arith.constant 0 : index
    %15 = vector.load %arg2[%c0_12, %c0_13] : memref<128x27xf32, #tpu.memory_space<vmem>>, vector<128x27xf32>
    %cst_14 = arith.constant 0.000000e+00 : f32
    %16 = vector.broadcast %cst_14 : f32 to vector<128x144xf32>
    %c0_15 = arith.constant 0 : index
    %c0_16 = arith.constant 0 : index
    %c0_17 = arith.constant 0 : index
    %17 = vector.load %arg7[%c0_15, %c0_16, %c0_17] : memref<3x32x144xf32, #tpu.memory_space<vmem>>, vector<1x32x144xf32>
    %18 = vector.shape_cast %17 : vector<1x32x144xf32> to vector<32x144xf32>
    %cst_18 = arith.constant dense<0.000000e+00> : vector<128x144xf32>
    %19 = tpu.matmul %14, %18, %cst_18 {dimension_numbers = #tpu.dot_dimension_numbers<[1], [0], [0], [1], [0, 0, 1, 1], [], []>} : vector<128x32xf32>, vector<32x144xf32>, vector<128x144xf32> -> vector<128x144xf32>
    %c0_19 = arith.constant 0 : index
    %c0_20 = arith.constant 0 : index
    %c0_21 = arith.constant 0 : index
    %20 = vector.load %arg8[%c0_19, %c0_20, %c0_21] : memref<3x1x144xf32, #tpu.memory_space<vmem>>, vector<1x1x144xf32>
    %21 = vector.shape_cast %20 : vector<1x1x144xf32> to vector<1x144xf32>
    %22 = vector.broadcast %21 : vector<1x144xf32> to vector<128x144xf32>
    %23 = arith.addf %19, %22 : vector<128x144xf32>
    %c0_22 = arith.constant 0 : index
    %c0_23 = arith.constant 0 : index
    %c0_24 = arith.constant 0 : index
    %24 = vector.load %arg9[%c0_22, %c0_23, %c0_24] : memref<3x27x144xf32, #tpu.memory_space<vmem>>, vector<1x27x144xf32>
    %25 = vector.shape_cast %24 : vector<1x27x144xf32> to vector<27x144xf32>
    %cst_25 = arith.constant dense<0.000000e+00> : vector<128x144xf32>
    %26 = tpu.matmul %15, %25, %cst_25 {dimension_numbers = #tpu.dot_dimension_numbers<[1], [0], [0], [1], [0, 0, 1, 1], [], []>} : vector<128x27xf32>, vector<27x144xf32>, vector<128x144xf32> -> vector<128x144xf32>
    %27 = arith.mulf %23, %26 : vector<128x144xf32>
    %28 = arith.addf %16, %27 : vector<128x144xf32>
    %c1 = arith.constant 1 : index
    %c0_26 = arith.constant 0 : index
    %c0_27 = arith.constant 0 : index
    %29 = vector.load %arg7[%c1, %c0_26, %c0_27] : memref<3x32x144xf32, #tpu.memory_space<vmem>>, vector<1x32x144xf32>
    %30 = vector.shape_cast %29 : vector<1x32x144xf32> to vector<32x144xf32>
    %cst_28 = arith.constant dense<0.000000e+00> : vector<128x144xf32>
    %31 = tpu.matmul %14, %30, %cst_28 {dimension_numbers = #tpu.dot_dimension_numbers<[1], [0], [0], [1], [0, 0, 1, 1], [], []>} : vector<128x32xf32>, vector<32x144xf32>, vector<128x144xf32> -> vector<128x144xf32>
    %c1_29 = arith.constant 1 : index
    %c0_30 = arith.constant 0 : index
    %c0_31 = arith.constant 0 : index
    %32 = vector.load %arg8[%c1_29, %c0_30, %c0_31] : memref<3x1x144xf32, #tpu.memory_space<vmem>>, vector<1x1x144xf32>
    %33 = vector.shape_cast %32 : vector<1x1x144xf32> to vector<1x144xf32>
    %34 = vector.broadcast %33 : vector<1x144xf32> to vector<128x144xf32>
    %35 = arith.addf %31, %34 : vector<128x144xf32>
    %c1_32 = arith.constant 1 : index
    %c0_33 = arith.constant 0 : index
    %c0_34 = arith.constant 0 : index
    %36 = vector.load %arg9[%c1_32, %c0_33, %c0_34] : memref<3x27x144xf32, #tpu.memory_space<vmem>>, vector<1x27x144xf32>
    %37 = vector.shape_cast %36 : vector<1x27x144xf32> to vector<27x144xf32>
    %cst_35 = arith.constant dense<0.000000e+00> : vector<128x144xf32>
    %38 = tpu.matmul %15, %37, %cst_35 {dimension_numbers = #tpu.dot_dimension_numbers<[1], [0], [0], [1], [0, 0, 1, 1], [], []>} : vector<128x27xf32>, vector<27x144xf32>, vector<128x144xf32> -> vector<128x144xf32>
    %39 = arith.mulf %35, %38 : vector<128x144xf32>
    %40 = arith.addf %28, %39 : vector<128x144xf32>
    %c2 = arith.constant 2 : index
    %c0_36 = arith.constant 0 : index
    %c0_37 = arith.constant 0 : index
    %41 = vector.load %arg7[%c2, %c0_36, %c0_37] : memref<3x32x144xf32, #tpu.memory_space<vmem>>, vector<1x32x144xf32>
    %42 = vector.shape_cast %41 : vector<1x32x144xf32> to vector<32x144xf32>
    %cst_38 = arith.constant dense<0.000000e+00> : vector<128x144xf32>
    %43 = tpu.matmul %14, %42, %cst_38 {dimension_numbers = #tpu.dot_dimension_numbers<[1], [0], [0], [1], [0, 0, 1, 1], [], []>} : vector<128x32xf32>, vector<32x144xf32>, vector<128x144xf32> -> vector<128x144xf32>
    %c2_39 = arith.constant 2 : index
    %c0_40 = arith.constant 0 : index
    %c0_41 = arith.constant 0 : index
    %44 = vector.load %arg8[%c2_39, %c0_40, %c0_41] : memref<3x1x144xf32, #tpu.memory_space<vmem>>, vector<1x1x144xf32>
    %45 = vector.shape_cast %44 : vector<1x1x144xf32> to vector<1x144xf32>
    %46 = vector.broadcast %45 : vector<1x144xf32> to vector<128x144xf32>
    %47 = arith.addf %43, %46 : vector<128x144xf32>
    %c2_42 = arith.constant 2 : index
    %c0_43 = arith.constant 0 : index
    %c0_44 = arith.constant 0 : index
    %48 = vector.load %arg9[%c2_42, %c0_43, %c0_44] : memref<3x27x144xf32, #tpu.memory_space<vmem>>, vector<1x27x144xf32>
    %49 = vector.shape_cast %48 : vector<1x27x144xf32> to vector<27x144xf32>
    %cst_45 = arith.constant dense<0.000000e+00> : vector<128x144xf32>
    %50 = tpu.matmul %15, %49, %cst_45 {dimension_numbers = #tpu.dot_dimension_numbers<[1], [0], [0], [1], [0, 0, 1, 1], [], []>} : vector<128x27xf32>, vector<27x144xf32>, vector<128x144xf32> -> vector<128x144xf32>
    %51 = arith.mulf %47, %50 : vector<128x144xf32>
    %52 = arith.addf %40, %51 : vector<128x144xf32>
    %c0_46 = arith.constant 0 : index
    %c0_47 = arith.constant 0 : index
    %53 = vector.load %arg10[%c0_46, %c0_47] : memref<128x144xf32, #tpu.memory_space<vmem>>, vector<128x144xf32>
    tpu.vector_store %arg10[%c0_46, %c0_47], %52 {strides = array<i32>} : memref<128x144xf32, #tpu.memory_space<vmem>>, vector<128x144xf32>,
    return
  }
  func.func @transform_0(%arg0: i32) -> (i32, i32) {
    %c0_i32 = arith.constant 0 : i32
    %c0_i32_0 = arith.constant 0 : i32
    return %arg0, %c0_i32 : i32, i32
  }
  func.func @transform_1(%arg0: i32) -> (i32, i32) {
    %c0_i32 = arith.constant 0 : i32
    %c0_i32_0 = arith.constant 0 : i32
    return %arg0, %c0_i32 : i32, i32
  }
  func.func @transform_2(%arg0: i32) -> (i32, i32) {
    %c0_i32 = arith.constant 0 : i32
    %c0_i32_0 = arith.constant 0 : i32
    %c0_i32_1 = arith.constant 0 : i32
    return %c0_i32, %c0_i32_0 : i32, i32
  }
  func.func @transform_3(%arg0: i32) -> (i32, i32) {
    %c0_i32 = arith.constant 0 : i32
    %c0_i32_0 = arith.constant 0 : i32
    %c0_i32_1 = arith.constant 0 : i32
    return %c0_i32, %c0_i32_0 : i32, i32
  }
  func.func @transform_4(%arg0: i32) -> (i32, i32) {
    %c0_i32 = arith.constant 0 : i32
    %c0_i32_0 = arith.constant 0 : i32
    %c0_i32_1 = arith.constant 0 : i32
    return %c0_i32, %c0_i32_0 : i32, i32
  }
  func.func @transform_5(%arg0: i32) -> (i32, i32) {
    %c0_i32 = arith.constant 0 : i32
    %c0_i32_0 = arith.constant 0 : i32
    %c0_i32_1 = arith.constant 0 : i32
    return %c0_i32, %c0_i32_0 : i32, i32
  }
  func.func @transform_6(%arg0: i32) -> (i32, i32, i32) {
    %c0_i32 = arith.constant 0 : i32
    %c0_i32_0 = arith.constant 0 : i32
    %c0_i32_1 = arith.constant 0 : i32
    %c0_i32_2 = arith.constant 0 : i32
    return %c0_i32, %c0_i32_0, %c0_i32_1 : i32, i32, i32
  }
  func.func @transform_7(%arg0: i32) -> (i32, i32, i32) {
    %c0_i32 = arith.constant 0 : i32
    %c0_i32_0 = arith.constant 0 : i32
    %c0_i32_1 = arith.constant 0 : i32
    %c0_i32_2 = arith.constant 0 : i32
    return %c0_i32, %c0_i32_0, %c0_i32_1 : i32, i32, i32
  }
  func.func @transform_8(%arg0: i32) -> (i32, i32, i32) {
    %c0_i32 = arith.constant 0 : i32
    %c0_i32_0 = arith.constant 0 : i32
    %c0_i32_1 = arith.constant 0 : i32
    %c0_i32_2 = arith.constant 0 : i32
    return %c0_i32, %c0_i32_0, %c0_i32_1 : i32, i32, i32
  }
  func.func @transform_9(%arg0: i32) -> (i32, i32) {
    %c0_i32 = arith.constant 0 : i32
    %c0_i32_0 = arith.constant 0 : i32
    return %arg0, %c0_i32 : i32, i32
  }
}

</mosaic_0001>

<llo_original>
// kernel: tpu_custom_call.1
$region0: #{tpu_custom_call.1}
  #allocation0 [shape = 'u32[]', space=smem, size = 0x4, offset = 0x4, fixed_abs, tag = 'smem constant byte address 0x4 - core index']
  #allocation1 [shape = 'u32[144,128]{1,0:T(1,128)}', space=vmem, size = 0x12000, scoped, tag = 'internal scratch']
  %s0 = inlined_call_operand.vmem [shape: f32[128,9], index: 0, kind: input, shape index: {}]
  %s1 = inlined_call_operand.vmem [shape: f32[128,27], index: 1, kind: input, shape index: {}]
  %s2 = inlined_call_operand.vmem [shape: f32[9,32], index: 2, kind: input, shape index: {}]
  %s3 = inlined_call_operand.vmem [shape: f32[1,32], index: 3, kind: input, shape index: {}]
  %s4 = inlined_call_operand.vmem [shape: f32[32,32], index: 4, kind: input, shape index: {}]
  %s5 = inlined_call_operand.vmem [shape: f32[1,32], index: 5, kind: input, shape index: {}]
  %s6 = inlined_call_operand.vmem [shape: f32[3,32,144], index: 6, kind: input, shape index: {}]
  %s7 = inlined_call_operand.vmem [shape: f32[3,1,144], index: 7, kind: input, shape index: {}]
  %s8 = inlined_call_operand.hbm [shape: f32[3,27,144], index: 8, kind: input, shape index: {}]
  %s9 = inlined_call_operand.vmem [shape: f32[128,144], index: 9, kind: output, shape index: {}]
  %s10 = sld [smem:[#allocation0]]
  $region50: #{tpu_custom_call.1} parent=0
    _
  %s12 = ssub.s32 1, %s10
  %s13 = scalar_select 0, %s12, %s10
  $region1: #{tpu_custom_call.1} parent=0
    #allocation2 [shape = 'u8[98304]{0}', space=vmem, size = 0x18000, scoped, tag = 'input window, operand 8, single buffered']
    #allocation3 [shape = 's32[1]{0}', space=sflag, size = 0x4, scoped, tag = 'scoped memory for tpu_custom_call.1']
    %14 = vsyncpa [#allocation3], 0
    // Predicated region
    $region2: #{tpu_custom_call.1} parent=1 // pred_check
      _
    $region3: #{tpu_custom_call.1} parent=1 // pred_check_branch
      %16 = sbr.rel (0) target = $region5
    $region4: #{tpu_custom_call.1} parent=1 // pred_region
      _
    $region5: #{tpu_custom_call.1} parent=1 // pred_fallthru
      _
    // Predicated region
    $region6: #{tpu_custom_call.1} parent=1 // pred_check
      _
    $region7: #{tpu_custom_call.1} parent=1 // pred_check_branch
      %18 = sbr.rel (0) target = $region9
    $region8: #{tpu_custom_call.1} parent=1 // pred_region
      _
    $region9: #{tpu_custom_call.1} parent=1 // pred_fallthru
      _
    // Predicated region
    $region10: #{tpu_custom_call.1} parent=1 // pred_check
      _
    $region11: #{tpu_custom_call.1} parent=1 // pred_check_branch
      %20 = sbr.rel (0) target = $region13
    $region12: #{tpu_custom_call.1} parent=1 // pred_region
      _
    $region13: #{tpu_custom_call.1} parent=1 // pred_fallthru
      _
    // Predicated region
    $region14: #{tpu_custom_call.1} parent=1 // pred_check
      _
    $region15: #{tpu_custom_call.1} parent=1 // pred_check_branch
      %22 = sbr.rel (0) target = $region17
    $region16: #{tpu_custom_call.1} parent=1 // pred_region
      _
    $region17: #{tpu_custom_call.1} parent=1 // pred_fallthru
      _
    // Predicated region
    $region18: #{tpu_custom_call.1} parent=1 // pred_check
      _
    $region19: #{tpu_custom_call.1} parent=1 // pred_check_branch
      %24 = sbr.rel (0) target = $region21
    $region20: #{tpu_custom_call.1} parent=1 // pred_region
      _
    $region21: #{tpu_custom_call.1} parent=1 // pred_fallthru
      _
    // Predicated region
    $region22: #{tpu_custom_call.1} parent=1 // pred_check
      _
    $region23: #{tpu_custom_call.1} parent=1 // pred_check_branch
      %26 = sbr.rel (0) target = $region25
    $region24: #{tpu_custom_call.1} parent=1 // pred_region
      _
    $region25: #{tpu_custom_call.1} parent=1 // pred_fallthru
      _
    // Predicated region
    $region26: #{tpu_custom_call.1} parent=1 // pred_check
      _
    $region27: #{tpu_custom_call.1} parent=1 // pred_check_branch
      %28 = sbr.rel (0) target = $region29
    $region28: #{tpu_custom_call.1} parent=1 // pred_region
      _
    $region29: #{tpu_custom_call.1} parent=1 // pred_fallthru
      _
    // Predicated region
    $region30: #{tpu_custom_call.1} parent=1 // pred_check
      _
    $region31: #{tpu_custom_call.1} parent=1 // pred_check_branch
      %30 = sbr.rel (0) target = $region33
    $region32: #{tpu_custom_call.1} parent=1 // pred_region
      _
    $region33: #{tpu_custom_call.1} parent=1 // pred_fallthru
      _
    // Predicated region
    $region34: #{tpu_custom_call.1} parent=1 // pred_check
      _
    $region35: #{tpu_custom_call.1} parent=1 // pred_check_branch
      %32 = sbr.rel (0) target = $region37
    $region36: #{tpu_custom_call.1} parent=1 // pred_region
      %s34 = ssub.s32 3072, 3072
      %35 = vsyncadd [#allocation3], %s34
      %s36 = sshll.u32 [#allocation2], 4
      %s37 = int_to_ptr.vmem [resolvable:$true] %s36
      %42 = dma.hbm_to_vmem [thread:$0]  %s8, 3072, %s37, [#allocation3], 256, 256, 16
    $region37: #{tpu_custom_call.1} parent=1 // pred_fallthru
      _
    // Predicated region
    $region38: #{tpu_custom_call.1} parent=1 // pred_check
      _
    $region39: #{tpu_custom_call.1} parent=1 // pred_check_branch
      %44 = sbr.rel (0) target = $region41
    $region40: #{tpu_custom_call.1} parent=1 // pred_region
      %45 = dma.done [#allocation3], 3072
    $region41: #{tpu_custom_call.1} parent=1 // pred_fallthru
      _
    %v46 = vld [vmem:[%s0] sm:$0xff]
    %v47 = vld [vmem:[%s0 + $0x8] sm:$0xff]
    %v48 = vld [vmem:[%s0 + $0x10] sm:$0xff]
    %v49 = vld [vmem:[%s0 + $0x18] sm:$0xff]
    %v50 = vld [vmem:[%s0 + $0x20] sm:$0xff]
    %v51 = vld [vmem:[%s0 + $0x28] sm:$0xff]
    %v52 = vld [vmem:[%s0 + $0x30] sm:$0xff]
    %v53 = vld [vmem:[%s0 + $0x38] sm:$0xff]
    %v54 = vld [vmem:[%s0 + $0x40] sm:$0xff]
    %v55 = vld [vmem:[%s0 + $0x48] sm:$0xff]
    %v56 = vld [vmem:[%s0 + $0x50] sm:$0xff]
    %v57 = vld [vmem:[%s0 + $0x58] sm:$0xff]
    %v58 = vld [vmem:[%s0 + $0x60] sm:$0xff]
    %v59 = vld [vmem:[%s0 + $0x68] sm:$0xff]
    %v60 = vld [vmem:[%s0 + $0x70] sm:$0xff]
    %v61 = vld [vmem:[%s0 + $0x78] sm:$0xff]
    %v62 = vld [vmem:[%s2] sm:$0xff]
    %v63 = vld [vmem:[%s2 + $0x8] sm:$0x1]
    %v64 = vld [vmem:[%s3] sm:$0x1]
    %v66 = vlaneseq
    %v67 = vshrl.u32 %v66, 7
    %v68 = vsub.s32 0, %v67
    %v69 = vrot.slane %v64, %v68
    %vm71 = vcmask 72704
    %v73 = vsel %vm71, %v46, 0
    %v76 = vsel %vm71, %v47, 0
    %v79 = vsel %vm71, %v48, 0
    %v82 = vsel %vm71, %v49, 0
    %v85 = vsel %vm71, %v50, 0
    %v88 = vsel %vm71, %v51, 0
    %v91 = vsel %vm71, %v52, 0
    %v94 = vsel %vm71, %v53, 0
    %v97 = vsel %vm71, %v54, 0
    %v100 = vsel %vm71, %v55, 0
    %v103 = vsel %vm71, %v56, 0
    %v106 = vsel %vm71, %v57, 0
    %v109 = vsel %vm71, %v58, 0
    %v112 = vsel %vm71, %v59, 0
    %v115 = vsel %vm71, %v60, 0
    %v118 = vsel %vm71, %v61, 0
    %vm120 = vcmask 1040384
    %v122 = vsel %vm120, %v63, 0
    %124 = vmatprep.subr.mxu0 0.0
    %125 = vmatpush1.msra.mxu0 0.0
    %126 = vmatprep.subr.mxu0 0.0
    %127 = vmatpush1.msra.mxu0 0.0
    %128 = vmatprep.subr.mxu0 0.0
    %129 = vmatpush1.msra.mxu0 0.0
    %130 = vmatprep.subr.mxu0 0.0
    %131 = vmatpush1.msra.mxu0 0.0
    %132 = vmatprep.subr.mxu0 0.0
    %133 = vmatpush1.msra.mxu0 0.0
    %134 = vmatprep.subr.mxu0 0.0
    %135 = vmatpush1.msra.mxu0 0.0
    %136 = vmatprep.subr.mxu0 0.0
    %137 = vmatpush1.msra.mxu0 0.0
    %138 = vmatprep.subr.mxu0 0.0
    %139 = vmatpush1.msra.mxu0 0.0
    %140 = vmatprep.subr.mxu0 0.0
    %141 = vmatpush1.msra.mxu0 0.0
    %142 = vmatprep.subr.mxu0 0.0
    %143 = vmatpush1.msra.mxu0 0.0
    %144 = vmatprep.subr.mxu0 0.0
    %145 = vmatpush1.msra.mxu0 0.0
    %146 = vmatprep.subr.mxu0 0.0
    %147 = vmatpush1.msra.mxu0 0.0
    %148 = vmatprep.subr.mxu0 0.0
    %149 = vmatpush1.msra.mxu0 0.0
    %150 = vmatprep.subr.mxu0 0.0
    %151 = vmatpush1.msra.mxu0 0.0
    %152 = vmatprep.subr.mxu0 0.0
    %153 = vmatpush1.msra.mxu0 %v122
    %154 = vmatprep.subr.mxu0 0.0
    %155 = vmatpush1.msra.mxu0 %v62
    %156 = vmatprep.subr.mxu0 0.0
    %157 = vmatpush2.msra.mxu0 0.0
    %158 = vmatprep.subr.mxu0 0.0
    %159 = vmatpush2.msra.mxu0 0.0
    %160 = vmatprep.subr.mxu0 0.0
    %161 = vmatpush2.msra.mxu0 0.0
    %162 = vmatprep.subr.mxu0 0.0
    %163 = vmatpush2.msra.mxu0 0.0
    %164 = vmatprep.subr.mxu0 0.0
    %165 = vmatpush2.msra.mxu0 0.0
    %166 = vmatprep.subr.mxu0 0.0
    %167 = vmatpush2.msra.mxu0 0.0
    %168 = vmatprep.subr.mxu0 0.0
    %169 = vmatpush2.msra.mxu0 0.0
    %170 = vmatprep.subr.mxu0 0.0
    %171 = vmatpush2.msra.mxu0 0.0
    %172 = vmatprep.subr.mxu0 0.0
    %173 = vmatpush2.msra.mxu0 0.0
    %174 = vmatprep.subr.mxu0 0.0
    %175 = vmatpush2.msra.mxu0 0.0
    %176 = vmatprep.subr.mxu0 0.0
    %177 = vmatpush2.msra.mxu0 0.0
    %178 = vmatprep.subr.mxu0 0.0
    %179 = vmatpush2.msra.mxu0 0.0
    %180 = vmatprep.subr.mxu0 0.0
    %181 = vmatpush2.msra.mxu0 0.0
    %182 = vmatprep.subr.mxu0 0.0
    %183 = vmatpush2.msra.mxu0 0.0
    %184 = vmatprep.subr.mxu0 0.0
    %185 = vmatpush2.msra.mxu0 0.0
    %186 = vmatprep.subr.mxu0 0.0
    %187 = vmatpush2.msra.mxu0 0.0
    %188 = vmatprep.mubr.f32.mxu0 0.0
    %189 = vmatmul.mubr.f32.gmra.mxu0 %v73
    %v190 = vpop.f32.mrf.mxu0
    %v191 = vadd.f32 %v69, %v190
    %v192 = vpop.f32.mrf.mxu0
    %193 = vmatprep.mubr.f32.mxu0 0.0
    %194 = vmatmul.mubr.f32.gmra.mxu0 %v76
    %v195 = vpop.f32.mrf.mxu0
    %v196 = vadd.f32 %v69, %v195
    %v197 = vpop.f32.mrf.mxu0
    %198 = vmatprep.mubr.f32.mxu0 0.0
    %199 = vmatmul.mubr.f32.gmra.mxu0 %v79
    %v200 = vpop.f32.mrf.mxu0
    %v201 = vadd.f32 %v69, %v200
    %v202 = vpop.f32.mrf.mxu0
    %203 = vmatprep.mubr.f32.mxu0 0.0
    %204 = vmatmul.mubr.f32.gmra.mxu0 %v82
    %v205 = vpop.f32.mrf.mxu0
    %v206 = vadd.f32 %v69, %v205
    %v207 = vpop.f32.mrf.mxu0
    %208 = vmatprep.mubr.f32.mxu0 0.0
    %209 = vmatmul.mubr.f32.gmra.mxu0 %v85
    %v210 = vpop.f32.mrf.mxu0
    %v211 = vadd.f32 %v69, %v210
    %v212 = vpop.f32.mrf.mxu0
    %213 = vmatprep.mubr.f32.mxu0 0.0
    %214 = vmatmul.mubr.f32.gmra.mxu0 %v88
    %v215 = vpop.f32.mrf.mxu0
    %v216 = vadd.f32 %v69, %v215
    %v217 = vpop.f32.mrf.mxu0
    %218 = vmatprep.mubr.f32.mxu0 0.0
    %219 = vmatmul.mubr.f32.gmra.mxu0 %v91
    %v220 = vpop.f32.mrf.mxu0
    %v221 = vadd.f32 %v69, %v220
    %v222 = vpop.f32.mrf.mxu0
    %223 = vmatprep.mubr.f32.mxu0 0.0
    %224 = vmatmul.mubr.f32.gmra.mxu0 %v94
    %v225 = vpop.f32.mrf.mxu0
    %v226 = vadd.f32 %v69, %v225
    %v227 = vpop.f32.mrf.mxu0
    %228 = vmatprep.mubr.f32.mxu0 0.0
    %229 = vmatmul.mubr.f32.gmra.mxu0 %v97
    %v230 = vpop.f32.mrf.mxu0
    %v231 = vadd.f32 %v69, %v230
    %v232 = vpop.f32.mrf.mxu0
    %233 = vmatprep.mubr.f32.mxu0 0.0
    %234 = vmatmul.mubr.f32.gmra.mxu0 %v100
    %v235 = vpop.f32.mrf.mxu0
    %v236 = vadd.f32 %v69, %v235
    %v237 = vpop.f32.mrf.mxu0
    %238 = vmatprep.mubr.f32.mxu0 0.0
    %239 = vmatmul.mubr.f32.gmra.mxu0 %v103
    %v240 = vpop.f32.mrf.mxu0
    %v241 = vadd.f32 %v69, %v240
    %v242 = vpop.f32.mrf.mxu0
    %243 = vmatprep.mubr.f32.mxu0 0.0
    %244 = vmatmul.mubr.f32.gmra.mxu0 %v106
    %v245 = vpop.f32.mrf.mxu0
    %v246 = vadd.f32 %v69, %v245
    %v247 = vpop.f32.mrf.mxu0
    %248 = vmatprep.mubr.f32.mxu0 0.0
    %249 = vmatmul.mubr.f32.gmra.mxu0 %v109
    %v250 = vpop.f32.mrf.mxu0
    %v251 = vadd.f32 %v69, %v250
    %v252 = vpop.f32.mrf.mxu0
    %253 = vmatprep.mubr.f32.mxu0 0.0
    %254 = vmatmul.mubr.f32.gmra.mxu0 %v112
    %v255 = vpop.f32.mrf.mxu0
    %v256 = vadd.f32 %v69, %v255
    %v257 = vpop.f32.mrf.mxu0
    %258 = vmatprep.mubr.f32.mxu0 0.0
    %259 = vmatmul.mubr.f32.gmra.mxu0 %v115
    %v260 = vpop.f32.mrf.mxu0
    %v261 = vadd.f32 %v69, %v260
    %v262 = vpop.f32.mrf.mxu0
    %263 = vmatprep.mubr.f32.mxu0 0.0
    %264 = vmatmul.mubr.f32.gmra.mxu0 %v118
    %v265 = vpop.f32.mrf.mxu0
    %v266 = vadd.f32 %v69, %v265
    %v267 = vpop.f32.mrf.mxu0
    %268 = vdwg.mxu0
    %v269 = vmax.f32 %v191, 0.0
    %v270 = vmax.f32 %v196, 0.0
    %v271 = vmax.f32 %v201, 0.0
    %v272 = vmax.f32 %v206, 0.0
    %v273 = vmax.f32 %v211, 0.0
    %v274 = vmax.f32 %v216, 0.0
    %v275 = vmax.f32 %v221, 0.0
    %v276 = vmax.f32 %v226, 0.0
    %v277 = vmax.f32 %v231, 0.0
    %v278 = vmax.f32 %v236, 0.0
    %v279 = vmax.f32 %v241, 0.0
    %v280 = vmax.f32 %v246, 0.0
    %v281 = vmax.f32 %v251, 0.0
    %v282 = vmax.f32 %v256, 0.0
    %v283 = vmax.f32 %v261, 0.0
    %v284 = vmax.f32 %v266, 0.0
    %v285 = vld [vmem:[%s4] sm:$0xff]
    %v286 = vld [vmem:[%s4 + $0x8] sm:$0xff]
    %v287 = vld [vmem:[%s4 + $0x10] sm:$0xff]
    %v288 = vld [vmem:[%s4 + $0x18] sm:$0xff]
    %v289 = vld [vmem:[%s5] sm:$0x1]
    %v291 = vlaneseq
    %v292 = vshrl.u32 %v291, 7
    %v293 = vsub.s32 0, %v292
    %v294 = vrot.slane %v289, %v293
    %vm296 = vcmask 261120
    %v298 = vsel %vm296, %v269, 0
    %v301 = vsel %vm296, %v270, 0
    %v304 = vsel %vm296, %v271, 0
    %v307 = vsel %vm296, %v272, 0
    %v310 = vsel %vm296, %v273, 0
    %v313 = vsel %vm296, %v274, 0
    %v316 = vsel %vm296, %v275, 0
    %v319 = vsel %vm296, %v276, 0
    %v322 = vsel %vm296, %v277, 0
    %v325 = vsel %vm296, %v278, 0
    %v328 = vsel %vm296, %v279, 0
    %v331 = vsel %vm296, %v280, 0
    %v334 = vsel %vm296, %v281, 0
    %v337 = vsel %vm296, %v282, 0
    %v340 = vsel %vm296, %v283, 0
    %v343 = vsel %vm296, %v284, 0
    %345 = vmatprep.subr.mxu0 0.0
    %346 = vmatpush1.msra.mxu0 0.0
    %347 = vmatprep.subr.mxu0 0.0
    %348 = vmatpush1.msra.mxu0 0.0
    %349 = vmatprep.subr.mxu0 0.0
    %350 = vmatpush1.msra.mxu0 0.0
    %351 = vmatprep.subr.mxu0 0.0
    %352 = vmatpush1.msra.mxu0 0.0
    %353 = vmatprep.subr.mxu0 0.0
    %354 = vmatpush1.msra.mxu0 0.0
    %355 = vmatprep.subr.mxu0 0.0
    %356 = vmatpush1.msra.mxu0 0.0
    %357 = vmatprep.subr.mxu0 0.0
    %358 = vmatpush1.msra.mxu0 0.0
    %359 = vmatprep.subr.mxu0 0.0
    %360 = vmatpush1.msra.mxu0 0.0
    %361 = vmatprep.subr.mxu0 0.0
    %362 = vmatpush1.msra.mxu0 0.0
    %363 = vmatprep.subr.mxu0 0.0
    %364 = vmatpush1.msra.mxu0 0.0
    %365 = vmatprep.subr.mxu0 0.0
    %366 = vmatpush1.msra.mxu0 0.0
    %367 = vmatprep.subr.mxu0 0.0
    %368 = vmatpush1.msra.mxu0 0.0
    %369 = vmatprep.subr.mxu0 0.0
    %370 = vmatpush1.msra.mxu0 %v288
    %371 = vmatprep.subr.mxu0 0.0
    %372 = vmatpush1.msra.mxu0 %v287
    %373 = vmatprep.subr.mxu0 0.0
    %374 = vmatpush1.msra.mxu0 %v286
    %375 = vmatprep.subr.mxu0 0.0
    %376 = vmatpush1.msra.mxu0 %v285
    %377 = vmatprep.subr.mxu0 0.0
    %378 = vmatpush2.msra.mxu0 0.0
    %379 = vmatprep.subr.mxu0 0.0
    %380 = vmatpush2.msra.mxu0 0.0
    %381 = vmatprep.subr.mxu0 0.0
    %382 = vmatpush2.msra.mxu0 0.0
    %383 = vmatprep.subr.mxu0 0.0
    %384 = vmatpush2.msra.mxu0 0.0
    %385 = vmatprep.subr.mxu0 0.0
    %386 = vmatpush2.msra.mxu0 0.0
    %387 = vmatprep.subr.mxu0 0.0
    %388 = vmatpush2.msra.mxu0 0.0
    %389 = vmatprep.subr.mxu0 0.0
    %390 = vmatpush2.msra.mxu0 0.0
    %391 = vmatprep.subr.mxu0 0.0
    %392 = vmatpush2.msra.mxu0 0.0
    %393 = vmatprep.subr.mxu0 0.0
    %394 = vmatpush2.msra.mxu0 0.0
    %395 = vmatprep.subr.mxu0 0.0
    %396 = vmatpush2.msra.mxu0 0.0
    %397 = vmatprep.subr.mxu0 0.0
    %398 = vmatpush2.msra.mxu0 0.0
    %399 = vmatprep.subr.mxu0 0.0
    %400 = vmatpush2.msra.mxu0 0.0
    %401 = vmatprep.subr.mxu0 0.0
    %402 = vmatpush2.msra.mxu0 0.0
    %403 = vmatprep.subr.mxu0 0.0
    %404 = vmatpush2.msra.mxu0 0.0
    %405 = vmatprep.subr.mxu0 0.0
    %406 = vmatpush2.msra.mxu0 0.0
    %407 = vmatprep.subr.mxu0 0.0
    %408 = vmatpush2.msra.mxu0 0.0
    %409 = vmatprep.mubr.f32.mxu0 0.0
    %410 = vmatmul.mubr.f32.gmra.mxu0 %v298
    %v411 = vpop.f32.mrf.mxu0
    %v412 = vadd.f32 %v294, %v411
    %v413 = vpop.f32.mrf.mxu0
    %414 = vmatprep.mubr.f32.mxu0 0.0
    %415 = vmatmul.mubr.f32.gmra.mxu0 %v301
    %v416 = vpop.f32.mrf.mxu0
    %v417 = vadd.f32 %v294, %v416
    %v418 = vpop.f32.mrf.mxu0
    %419 = vmatprep.mubr.f32.mxu0 0.0
    %420 = vmatmul.mubr.f32.gmra.mxu0 %v304
    %v421 = vpop.f32.mrf.mxu0
    %v422 = vadd.f32 %v294, %v421
    %v423 = vpop.f32.mrf.mxu0
    %424 = vmatprep.mubr.f32.mxu0 0.0
    %425 = vmatmul.mubr.f32.gmra.mxu0 %v307
    %v426 = vpop.f32.mrf.mxu0
    %v427 = vadd.f32 %v294, %v426
    %v428 = vpop.f32.mrf.mxu0
    %429 = vmatprep.mubr.f32.mxu0 0.0
    %430 = vmatmul.mubr.f32.gmra.mxu0 %v310
    %v431 = vpop.f32.mrf.mxu0
    %v432 = vadd.f32 %v294, %v431
    %v433 = vpop.f32.mrf.mxu0
    %434 = vmatprep.mubr.f32.mxu0 0.0
    %435 = vmatmul.mubr.f32.gmra.mxu0 %v313
    %v436 = vpop.f32.mrf.mxu0
    %v437 = vadd.f32 %v294, %v436
    %v438 = vpop.f32.mrf.mxu0
    %439 = vmatprep.mubr.f32.mxu0 0.0
    %440 = vmatmul.mubr.f32.gmra.mxu0 %v316
    %v441 = vpop.f32.mrf.mxu0
    %v442 = vadd.f32 %v294, %v441
    %v443 = vpop.f32.mrf.mxu0
    %444 = vmatprep.mubr.f32.mxu0 0.0
    %445 = vmatmul.mubr.f32.gmra.mxu0 %v319
    %v446 = vpop.f32.mrf.mxu0
    %v447 = vadd.f32 %v294, %v446
    %v448 = vpop.f32.mrf.mxu0
    %449 = vmatprep.mubr.f32.mxu0 0.0
    %450 = vmatmul.mubr.f32.gmra.mxu0 %v322
    %v451 = vpop.f32.mrf.mxu0
    %v452 = vadd.f32 %v294, %v451
    %v453 = vpop.f32.mrf.mxu0
    %454 = vmatprep.mubr.f32.mxu0 0.0
    %455 = vmatmul.mubr.f32.gmra.mxu0 %v325
    %v456 = vpop.f32.mrf.mxu0
    %v457 = vadd.f32 %v294, %v456
    %v458 = vpop.f32.mrf.mxu0
    %459 = vmatprep.mubr.f32.mxu0 0.0
    %460 = vmatmul.mubr.f32.gmra.mxu0 %v328
    %v461 = vpop.f32.mrf.mxu0
    %v462 = vadd.f32 %v294, %v461
    %v463 = vpop.f32.mrf.mxu0
    %464 = vmatprep.mubr.f32.mxu0 0.0
    %465 = vmatmul.mubr.f32.gmra.mxu0 %v331
    %v466 = vpop.f32.mrf.mxu0
    %v467 = vadd.f32 %v294, %v466
    %v468 = vpop.f32.mrf.mxu0
    %469 = vmatprep.mubr.f32.mxu0 0.0
    %470 = vmatmul.mubr.f32.gmra.mxu0 %v334
    %v471 = vpop.f32.mrf.mxu0
    %v472 = vadd.f32 %v294, %v471
    %v473 = vpop.f32.mrf.mxu0
    %474 = vmatprep.mubr.f32.mxu0 0.0
    %475 = vmatmul.mubr.f32.gmra.mxu0 %v337
    %v476 = vpop.f32.mrf.mxu0
    %v477 = vadd.f32 %v294, %v476
    %v478 = vpop.f32.mrf.mxu0
    %479 = vmatprep.mubr.f32.mxu0 0.0
    %480 = vmatmul.mubr.f32.gmra.mxu0 %v340
    %v481 = vpop.f32.mrf.mxu0
    %v482 = vadd.f32 %v294, %v481
    %v483 = vpop.f32.mrf.mxu0
    %484 = vmatprep.mubr.f32.mxu0 0.0
    %485 = vmatmul.mubr.f32.gmra.mxu0 %v343
    %v486 = vpop.f32.mrf.mxu0
    %v487 = vadd.f32 %v294, %v486
    %v488 = vpop.f32.mrf.mxu0
    %489 = vdwg.mxu0
    %v490 = vmax.f32 %v412, 0.0
    %v491 = vmax.f32 %v417, 0.0
    %v492 = vmax.f32 %v422, 0.0
    %v493 = vmax.f32 %v427, 0.0
    %v494 = vmax.f32 %v432, 0.0
    %v495 = vmax.f32 %v437, 0.0
    %v496 = vmax.f32 %v442, 0.0
    %v497 = vmax.f32 %v447, 0.0
    %v498 = vmax.f32 %v452, 0.0
    %v499 = vmax.f32 %v457, 0.0
    %v500 = vmax.f32 %v462, 0.0
    %v501 = vmax.f32 %v467, 0.0
    %v502 = vmax.f32 %v472, 0.0
    %v503 = vmax.f32 %v477, 0.0
    %v504 = vmax.f32 %v482, 0.0
    %v505 = vmax.f32 %v487, 0.0
    %v506 = vld [vmem:[%s1] sm:$0xff]
    %v507 = vld [vmem:[%s1 + $0x8] sm:$0xff]
    %v508 = vld [vmem:[%s1 + $0x10] sm:$0xff]
    %v509 = vld [vmem:[%s1 + $0x18] sm:$0xff]
    %v510 = vld [vmem:[%s1 + $0x20] sm:$0xff]
    %v511 = vld [vmem:[%s1 + $0x28] sm:$0xff]
    %v512 = vld [vmem:[%s1 + $0x30] sm:$0xff]
    %v513 = vld [vmem:[%s1 + $0x38] sm:$0xff]
    %v514 = vld [vmem:[%s1 + $0x40] sm:$0xff]
    %v515 = vld [vmem:[%s1 + $0x48] sm:$0xff]
    %v516 = vld [vmem:[%s1 + $0x50] sm:$0xff]
    %v517 = vld [vmem:[%s1 + $0x58] sm:$0xff]
    %v518 = vld [vmem:[%s1 + $0x60] sm:$0xff]
    %v519 = vld [vmem:[%s1 + $0x68] sm:$0xff]
    %v520 = vld [vmem:[%s1 + $0x70] sm:$0xff]
    %v521 = vld [vmem:[%s1 + $0x78] sm:$0xff]
    %v522 = vld [vmem:[%s6] sm:$0xff]
    %v523 = vld [vmem:[%s6 + $0x8] sm:$0xff]
    %v524 = vld [vmem:[%s6 + $0x10] sm:$0xff]
    %v525 = vld [vmem:[%s6 + $0x18] sm:$0xff]
    %v526 = vld [vmem:[%s6 + $0x20] sm:$0xff]
    %v527 = vld [vmem:[%s6 + $0x28] sm:$0xff]
    %v528 = vld [vmem:[%s6 + $0x30] sm:$0xff]
    %v529 = vld [vmem:[%s6 + $0x38] sm:$0xff]
    %v530 = vld [vmem:[%s7] sm:$0x3]
    %v532 = vlaneseq
    %v533 = vshrl.u32 %v532, 7
    %v534 = vsub.s32 0, %v533
    %v535 = vrot.slane %v530, %v534
    %v536 = vlaneseq
    %v537 = vshrl.u32 %v536, 7
    %v538 = vsub.s32 1, %v537
    %v539 = vrot.slane %v530, %v538
    %v543 = vsel %vm296, %v490, 0
    %v546 = vsel %vm296, %v491, 0
    %v549 = vsel %vm296, %v492, 0
    %v552 = vsel %vm296, %v493, 0
    %v555 = vsel %vm296, %v494, 0
    %v558 = vsel %vm296, %v495, 0
    %v561 = vsel %vm296, %v496, 0
    %v564 = vsel %vm296, %v497, 0
    %v567 = vsel %vm296, %v498, 0
    %v570 = vsel %vm296, %v499, 0
    %v573 = vsel %vm296, %v500, 0
    %v576 = vsel %vm296, %v501, 0
    %v579 = vsel %vm296, %v502, 0
    %v582 = vsel %vm296, %v503, 0
    %v585 = vsel %vm296, %v504, 0
    %v588 = vsel %vm296, %v505, 0
    %590 = vmatprep.subr.mxu0 0.0
    %591 = vmatpush1.msra.mxu0 0.0
    %592 = vmatprep.subr.mxu0 0.0
    %593 = vmatpush1.msra.mxu0 0.0
    %594 = vmatprep.subr.mxu0 0.0
    %595 = vmatpush1.msra.mxu0 0.0
    %596 = vmatprep.subr.mxu0 0.0
    %597 = vmatpush1.msra.mxu0 0.0
    %598 = vmatprep.subr.mxu0 0.0
    %599 = vmatpush1.msra.mxu0 0.0
    %600 = vmatprep.subr.mxu0 0.0
    %601 = vmatpush1.msra.mxu0 0.0
    %602 = vmatprep.subr.mxu0 0.0
    %603 = vmatpush1.msra.mxu0 0.0
    %604 = vmatprep.subr.mxu0 0.0
    %605 = vmatpush1.msra.mxu0 0.0
    %606 = vmatprep.subr.mxu0 0.0
    %607 = vmatpush1.msra.mxu0 0.0
    %608 = vmatprep.subr.mxu0 0.0
    %609 = vmatpush1.msra.mxu0 0.0
    %610 = vmatprep.subr.mxu0 0.0
    %611 = vmatpush1.msra.mxu0 0.0
    %612 = vmatprep.subr.mxu0 0.0
    %613 = vmatpush1.msra.mxu0 0.0
    %614 = vmatprep.subr.mxu0 %v529
    %615 = vmatpush1.msra.mxu0 %v528
    %616 = vmatprep.subr.mxu0 %v527
    %617 = vmatpush1.msra.mxu0 %v526
    %618 = vmatprep.subr.mxu0 %v525
    %619 = vmatpush1.msra.mxu0 %v524
    %620 = vmatprep.subr.mxu0 %v523
    %621 = vmatpush1.msra.mxu0 %v522
    %622 = vmatprep.subr.mxu0 0.0
    %623 = vmatpush2.msra.mxu0 0.0
    %624 = vmatprep.subr.mxu0 0.0
    %625 = vmatpush2.msra.mxu0 0.0
    %626 = vmatprep.subr.mxu0 0.0
    %627 = vmatpush2.msra.mxu0 0.0
    %628 = vmatprep.subr.mxu0 0.0
    %629 = vmatpush2.msra.mxu0 0.0
    %630 = vmatprep.subr.mxu0 0.0
    %631 = vmatpush2.msra.mxu0 0.0
    %632 = vmatprep.subr.mxu0 0.0
    %633 = vmatpush2.msra.mxu0 0.0
    %634 = vmatprep.subr.mxu0 0.0
    %635 = vmatpush2.msra.mxu0 0.0
    %636 = vmatprep.subr.mxu0 0.0
    %637 = vmatpush2.msra.mxu0 0.0
    %638 = vmatprep.subr.mxu0 0.0
    %639 = vmatpush2.msra.mxu0 0.0
    %640 = vmatprep.subr.mxu0 0.0
    %641 = vmatpush2.msra.mxu0 0.0
    %642 = vmatprep.subr.mxu0 0.0
    %643 = vmatpush2.msra.mxu0 0.0
    %644 = vmatprep.subr.mxu0 0.0
    %645 = vmatpush2.msra.mxu0 0.0
    %646 = vmatprep.subr.mxu0 0.0
    %647 = vmatpush2.msra.mxu0 0.0
    %648 = vmatprep.subr.mxu0 0.0
    %649 = vmatpush2.msra.mxu0 0.0
    %650 = vmatprep.subr.mxu0 0.0
    %651 = vmatpush2.msra.mxu0 0.0
    %652 = vmatprep.subr.mxu0 0.0
    %653 = vmatpush2.msra.mxu0 0.0
    %654 = vmatprep.mubr.f32.mxu0 0.0
    %655 = vmatmul.mubr.f32.gmra.mxu0 %v543
    %v656 = vpop.f32.mrf.mxu0
    %v657 = vadd.f32 %v535, %v656
    %v658 = vpop.f32.mrf.mxu0
    %v659 = vadd.f32 %v539, %v658
    %660 = vmatprep.mubr.f32.mxu0 0.0
    %661 = vmatmul.mubr.f32.gmra.mxu0 %v546
    %v662 = vpop.f32.mrf.mxu0
    %v663 = vadd.f32 %v535, %v662
    %v664 = vpop.f32.mrf.mxu0
    %v665 = vadd.f32 %v539, %v664
    %666 = vmatprep.mubr.f32.mxu0 0.0
    %667 = vmatmul.mubr.f32.gmra.mxu0 %v549
    %v668 = vpop.f32.mrf.mxu0
    %v669 = vadd.f32 %v535, %v668
    %v670 = vpop.f32.mrf.mxu0
    %v671 = vadd.f32 %v539, %v670
    %672 = vmatprep.mubr.f32.mxu0 0.0
    %673 = vmatmul.mubr.f32.gmra.mxu0 %v552
    %v674 = vpop.f32.mrf.mxu0
    %v675 = vadd.f32 %v535, %v674
    %v676 = vpop.f32.mrf.mxu0
    %v677 = vadd.f32 %v539, %v676
    %678 = vmatprep.mubr.f32.mxu0 0.0
    %679 = vmatmul.mubr.f32.gmra.mxu0 %v555
    %v680 = vpop.f32.mrf.mxu0
    %v681 = vadd.f32 %v535, %v680
    %v682 = vpop.f32.mrf.mxu0
    %v683 = vadd.f32 %v539, %v682
    %684 = vmatprep.mubr.f32.mxu0 0.0
    %685 = vmatmul.mubr.f32.gmra.mxu0 %v558
    %v686 = vpop.f32.mrf.mxu0
    %v687 = vadd.f32 %v535, %v686
    %v688 = vpop.f32.mrf.mxu0
    %v689 = vadd.f32 %v539, %v688
    %690 = vmatprep.mubr.f32.mxu0 0.0
    %691 = vmatmul.mubr.f32.gmra.mxu0 %v561
    %v692 = vpop.f32.mrf.mxu0
    %v693 = vadd.f32 %v535, %v692
    %v694 = vpop.f32.mrf.mxu0
    %v695 = vadd.f32 %v539, %v694
    %696 = vmatprep.mubr.f32.mxu0 0.0
    %697 = vmatmul.mubr.f32.gmra.mxu0 %v564
    %v698 = vpop.f32.mrf.mxu0
    %v699 = vadd.f32 %v535, %v698
    %v700 = vpop.f32.mrf.mxu0
    %v701 = vadd.f32 %v539, %v700
    %702 = vmatprep.mubr.f32.mxu0 0.0
    %703 = vmatmul.mubr.f32.gmra.mxu0 %v567
    %v704 = vpop.f32.mrf.mxu0
    %v705 = vadd.f32 %v535, %v704
    %v706 = vpop.f32.mrf.mxu0
    %v707 = vadd.f32 %v539, %v706
    %708 = vmatprep.mubr.f32.mxu0 0.0
    %709 = vmatmul.mubr.f32.gmra.mxu0 %v570
    %v710 = vpop.f32.mrf.mxu0
    %v711 = vadd.f32 %v535, %v710
    %v712 = vpop.f32.mrf.mxu0
    %v713 = vadd.f32 %v539, %v712
    %714 = vmatprep.mubr.f32.mxu0 0.0
    %715 = vmatmul.mubr.f32.gmra.mxu0 %v573
    %v716 = vpop.f32.mrf.mxu0
    %v717 = vadd.f32 %v535, %v716
    %v718 = vpop.f32.mrf.mxu0
    %v719 = vadd.f32 %v539, %v718
    %720 = vmatprep.mubr.f32.mxu0 0.0
    %721 = vmatmul.mubr.f32.gmra.mxu0 %v576
    %v722 = vpop.f32.mrf.mxu0
    %v723 = vadd.f32 %v535, %v722
    %v724 = vpop.f32.mrf.mxu0
    %v725 = vadd.f32 %v539, %v724
    %726 = vmatprep.mubr.f32.mxu0 0.0
    %727 = vmatmul.mubr.f32.gmra.mxu0 %v579
    %v728 = vpop.f32.mrf.mxu0
    %v729 = vadd.f32 %v535, %v728
    %v730 = vpop.f32.mrf.mxu0
    %v731 = vadd.f32 %v539, %v730
    %732 = vmatprep.mubr.f32.mxu0 0.0
    %733 = vmatmul.mubr.f32.gmra.mxu0 %v582
    %v734 = vpop.f32.mrf.mxu0
    %v735 = vadd.f32 %v535, %v734
    %v736 = vpop.f32.mrf.mxu0
    %v737 = vadd.f32 %v539, %v736
    %738 = vmatprep.mubr.f32.mxu0 0.0
    %739 = vmatmul.mubr.f32.gmra.mxu0 %v585
    %v740 = vpop.f32.mrf.mxu0
    %v741 = vadd.f32 %v535, %v740
    %v742 = vpop.f32.mrf.mxu0
    %v743 = vadd.f32 %v539, %v742
    %744 = vmatprep.mubr.f32.mxu0 0.0
    %745 = vmatmul.mubr.f32.gmra.mxu0 %v588
    %v746 = vpop.f32.mrf.mxu0
    %v747 = vadd.f32 %v535, %v746
    %v748 = vpop.f32.mrf.mxu0
    %v749 = vadd.f32 %v539, %v748
    %750 = vdwg.mxu0
    %v751 = vld [vmem:[#allocation2] sm:$0xff]
    %v752 = vld [vmem:[#allocation2 + $0x8] sm:$0xff]
    %v753 = vld [vmem:[#allocation2 + $0x10] sm:$0xff]
    %v754 = vld [vmem:[#allocation2 + $0x18] sm:$0xff]
    %v755 = vld [vmem:[#allocation2 + $0x20] sm:$0xff]
    %v756 = vld [vmem:[#allocation2 + $0x28] sm:$0xff]
    %v757 = vld [vmem:[#allocation2 + $0x30] sm:$0x7]
    %v758 = vld [vmem:[#allocation2 + $0x38] sm:$0x7]
    %vm759 = vcmask 220160
    %v761 = vsel %vm759, %v506, 0
    %v764 = vsel %vm759, %v507, 0
    %v767 = vsel %vm759, %v508, 0
    %v770 = vsel %vm759, %v509, 0
    %v773 = vsel %vm759, %v510, 0
    %v776 = vsel %vm759, %v511, 0
    %v779 = vsel %vm759, %v512, 0
    %v782 = vsel %vm759, %v513, 0
    %v785 = vsel %vm759, %v514, 0
    %v788 = vsel %vm759, %v515, 0
    %v791 = vsel %vm759, %v516, 0
    %v794 = vsel %vm759, %v517, 0
    %v797 = vsel %vm759, %v518, 0
    %v800 = vsel %vm759, %v519, 0
    %v803 = vsel %vm759, %v520, 0
    %v806 = vsel %vm759, %v521, 0
    %vm808 = vcmask 1042432
    %v810 = vsel %vm808, %v757, 0
    %v813 = vsel %vm808, %v758, 0
    %815 = vmatprep.subr.mxu0 0.0
    %816 = vmatpush1.msra.mxu0 0.0
    %817 = vmatprep.subr.mxu0 0.0
    %818 = vmatpush1.msra.mxu0 0.0
    %819 = vmatprep.subr.mxu0 0.0
    %820 = vmatpush1.msra.mxu0 0.0
    %821 = vmatprep.subr.mxu0 0.0
    %822 = vmatpush1.msra.mxu0 0.0
    %823 = vmatprep.subr.mxu0 0.0
    %824 = vmatpush1.msra.mxu0 0.0
    %825 = vmatprep.subr.mxu0 0.0
    %826 = vmatpush1.msra.mxu0 0.0
    %827 = vmatprep.subr.mxu0 0.0
    %828 = vmatpush1.msra.mxu0 0.0
    %829 = vmatprep.subr.mxu0 0.0
    %830 = vmatpush1.msra.mxu0 0.0
    %831 = vmatprep.subr.mxu0 0.0
    %832 = vmatpush1.msra.mxu0 0.0
    %833 = vmatprep.subr.mxu0 0.0
    %834 = vmatpush1.msra.mxu0 0.0
    %835 = vmatprep.subr.mxu0 0.0
    %836 = vmatpush1.msra.mxu0 0.0
    %837 = vmatprep.subr.mxu0 0.0
    %838 = vmatpush1.msra.mxu0 0.0
    %839 = vmatprep.subr.mxu0 %v813
    %840 = vmatpush1.msra.mxu0 %v810
    %841 = vmatprep.subr.mxu0 %v756
    %842 = vmatpush1.msra.mxu0 %v755
    %843 = vmatprep.subr.mxu0 %v754
    %844 = vmatpush1.msra.mxu0 %v753
    %845 = vmatprep.subr.mxu0 %v752
    %846 = vmatpush1.msra.mxu0 %v751
    %847 = vmatprep.subr.mxu0 0.0
    %848 = vmatpush2.msra.mxu0 0.0
    %849 = vmatprep.subr.mxu0 0.0
    %850 = vmatpush2.msra.mxu0 0.0
    %851 = vmatprep.subr.mxu0 0.0
    %852 = vmatpush2.msra.mxu0 0.0
    %853 = vmatprep.subr.mxu0 0.0
    %854 = vmatpush2.msra.mxu0 0.0
    %855 = vmatprep.subr.mxu0 0.0
    %856 = vmatpush2.msra.mxu0 0.0
    %857 = vmatprep.subr.mxu0 0.0
    %858 = vmatpush2.msra.mxu0 0.0
    %859 = vmatprep.subr.mxu0 0.0
    %860 = vmatpush2.msra.mxu0 0.0
    %861 = vmatprep.subr.mxu0 0.0
    %862 = vmatpush2.msra.mxu0 0.0
    %863 = vmatprep.subr.mxu0 0.0
    %864 = vmatpush2.msra.mxu0 0.0
    %865 = vmatprep.subr.mxu0 0.0
    %866 = vmatpush2.msra.mxu0 0.0
    %867 = vmatprep.subr.mxu0 0.0
    %868 = vmatpush2.msra.mxu0 0.0
    %869 = vmatprep.subr.mxu0 0.0
    %870 = vmatpush2.msra.mxu0 0.0
    %871 = vmatprep.subr.mxu0 0.0
    %872 = vmatpush2.msra.mxu0 0.0
    %873 = vmatprep.subr.mxu0 0.0
    %874 = vmatpush2.msra.mxu0 0.0
    %875 = vmatprep.subr.mxu0 0.0
    %876 = vmatpush2.msra.mxu0 0.0
    %877 = vmatprep.subr.mxu0 0.0
    %878 = vmatpush2.msra.mxu0 0.0
    %879 = vmatprep.mubr.f32.mxu0 0.0
    %880 = vmatmul.mubr.f32.gmra.mxu0 %v761
    %v881 = vpop.f32.mrf.mxu0
    %v882 = vadd.f32 0.0, %v881
    %v883 = vpop.f32.mrf.mxu0
    %v884 = vadd.f32 0.0, %v883
    %885 = vmatprep.mubr.f32.mxu0 0.0
    %886 = vmatmul.mubr.f32.gmra.mxu0 %v764
    %v887 = vpop.f32.mrf.mxu0
    %v888 = vadd.f32 0.0, %v887
    %v889 = vpop.f32.mrf.mxu0
    %v890 = vadd.f32 0.0, %v889
    %891 = vmatprep.mubr.f32.mxu0 0.0
    %892 = vmatmul.mubr.f32.gmra.mxu0 %v767
    %v893 = vpop.f32.mrf.mxu0
    %v894 = vadd.f32 0.0, %v893
    %v895 = vpop.f32.mrf.mxu0
    %v896 = vadd.f32 0.0, %v895
    %897 = vmatprep.mubr.f32.mxu0 0.0
    %898 = vmatmul.mubr.f32.gmra.mxu0 %v770
    %v899 = vpop.f32.mrf.mxu0
    %v900 = vadd.f32 0.0, %v899
    %v901 = vpop.f32.mrf.mxu0
    %v902 = vadd.f32 0.0, %v901
    %903 = vmatprep.mubr.f32.mxu0 0.0
    %904 = vmatmul.mubr.f32.gmra.mxu0 %v773
    %v905 = vpop.f32.mrf.mxu0
    %v906 = vadd.f32 0.0, %v905
    %v907 = vpop.f32.mrf.mxu0
    %v908 = vadd.f32 0.0, %v907
    %909 = vmatprep.mubr.f32.mxu0 0.0
    %910 = vmatmul.mubr.f32.gmra.mxu0 %v776
    %v911 = vpop.f32.mrf.mxu0
    %v912 = vadd.f32 0.0, %v911
    %v913 = vpop.f32.mrf.mxu0
    %v914 = vadd.f32 0.0, %v913
    %915 = vmatprep.mubr.f32.mxu0 0.0
    %916 = vmatmul.mubr.f32.gmra.mxu0 %v779
    %v917 = vpop.f32.mrf.mxu0
    %v918 = vadd.f32 0.0, %v917
    %v919 = vpop.f32.mrf.mxu0
    %v920 = vadd.f32 0.0, %v919
    %921 = vmatprep.mubr.f32.mxu0 0.0
    %922 = vmatmul.mubr.f32.gmra.mxu0 %v782
    %v923 = vpop.f32.mrf.mxu0
    %v924 = vadd.f32 0.0, %v923
    %v925 = vpop.f32.mrf.mxu0
    %v926 = vadd.f32 0.0, %v925
    %927 = vmatprep.mubr.f32.mxu0 0.0
    %928 = vmatmul.mubr.f32.gmra.mxu0 %v785
    %v929 = vpop.f32.mrf.mxu0
    %v930 = vadd.f32 0.0, %v929
    %v931 = vpop.f32.mrf.mxu0
    %v932 = vadd.f32 0.0, %v931
    %933 = vmatprep.mubr.f32.mxu0 0.0
    %934 = vmatmul.mubr.f32.gmra.mxu0 %v788
    %v935 = vpop.f32.mrf.mxu0
    %v936 = vadd.f32 0.0, %v935
    %v937 = vpop.f32.mrf.mxu0
    %v938 = vadd.f32 0.0, %v937
    %939 = vmatprep.mubr.f32.mxu0 0.0
    %940 = vmatmul.mubr.f32.gmra.mxu0 %v791
    %v941 = vpop.f32.mrf.mxu0
    %v942 = vadd.f32 0.0, %v941
    %v943 = vpop.f32.mrf.mxu0
    %v944 = vadd.f32 0.0, %v943
    %945 = vmatprep.mubr.f32.mxu0 0.0
    %946 = vmatmul.mubr.f32.gmra.mxu0 %v794
    %v947 = vpop.f32.mrf.mxu0
    %v948 = vadd.f32 0.0, %v947
    %v949 = vpop.f32.mrf.mxu0
    %v950 = vadd.f32 0.0, %v949
    %951 = vmatprep.mubr.f32.mxu0 0.0
    %952 = vmatmul.mubr.f32.gmra.mxu0 %v797
    %v953 = vpop.f32.mrf.mxu0
    %v954 = vadd.f32 0.0, %v953
    %v955 = vpop.f32.mrf.mxu0
    %v956 = vadd.f32 0.0, %v955
    %957 = vmatprep.mubr.f32.mxu0 0.0
    %958 = vmatmul.mubr.f32.gmra.mxu0 %v800
    %v959 = vpop.f32.mrf.mxu0
    %v960 = vadd.f32 0.0, %v959
    %v961 = vpop.f32.mrf.mxu0
    %v962 = vadd.f32 0.0, %v961
    %963 = vmatprep.mubr.f32.mxu0 0.0
    %964 = vmatmul.mubr.f32.gmra.mxu0 %v803
    %v965 = vpop.f32.mrf.mxu0
    %v966 = vadd.f32 0.0, %v965
    %v967 = vpop.f32.mrf.mxu0
    %v968 = vadd.f32 0.0, %v967
    %969 = vmatprep.mubr.f32.mxu0 0.0
    %970 = vmatmul.mubr.f32.gmra.mxu0 %v806
    %v971 = vpop.f32.mrf.mxu0
    %v972 = vadd.f32 0.0, %v971
    %v973 = vpop.f32.mrf.mxu0
    %v974 = vadd.f32 0.0, %v973
    %975 = vdwg.mxu0
    %v976 = vmul.f32 %v657, %v882
    %v977 = vmul.f32 %v659, %v884
    %v978 = vmul.f32 %v663, %v888
    %v979 = vmul.f32 %v665, %v890
    %v980 = vmul.f32 %v669, %v894
    %v981 = vmul.f32 %v671, %v896
    %v982 = vmul.f32 %v675, %v900
    %v983 = vmul.f32 %v677, %v902
    %v984 = vmul.f32 %v681, %v906
    %v985 = vmul.f32 %v683, %v908
    %v986 = vmul.f32 %v687, %v912
    %v987 = vmul.f32 %v689, %v914
    %v988 = vmul.f32 %v693, %v918
    %v989 = vmul.f32 %v695, %v920
    %v990 = vmul.f32 %v699, %v924
    %v991 = vmul.f32 %v701, %v926
    %v992 = vmul.f32 %v705, %v930
    %v993 = vmul.f32 %v707, %v932
    %v994 = vmul.f32 %v711, %v936
    %v995 = vmul.f32 %v713, %v938
    %v996 = vmul.f32 %v717, %v942
    %v997 = vmul.f32 %v719, %v944
    %v998 = vmul.f32 %v723, %v948
    %v999 = vmul.f32 %v725, %v950
    %v1000 = vmul.f32 %v729, %v954
    %v1001 = vmul.f32 %v731, %v956
    %v1002 = vmul.f32 %v735, %v960
    %v1003 = vmul.f32 %v737, %v962
    %v1004 = vmul.f32 %v741, %v966
    %v1005 = vmul.f32 %v743, %v968
    %v1006 = vmul.f32 %v747, %v972
    %v1007 = vmul.f32 %v749, %v974
    %v1008 = vadd.f32 %v976, 0.0
    %v1009 = vadd.f32 %v977, 0.0
    %v1010 = vadd.f32 %v978, 0.0
    %v1011 = vadd.f32 %v979, 0.0
    %v1012 = vadd.f32 %v980, 0.0
    %v1013 = vadd.f32 %v981, 0.0
    %v1014 = vadd.f32 %v982, 0.0
    %v1015 = vadd.f32 %v983, 0.0
    %v1016 = vadd.f32 %v984, 0.0
    %v1017 = vadd.f32 %v985, 0.0
    %v1018 = vadd.f32 %v986, 0.0
    %v1019 = vadd.f32 %v987, 0.0
    %v1020 = vadd.f32 %v988, 0.0
    %v1021 = vadd.f32 %v989, 0.0
    %v1022 = vadd.f32 %v990, 0.0
    %v1023 = vadd.f32 %v991, 0.0
    %v1024 = vadd.f32 %v992, 0.0
    %v1025 = vadd.f32 %v993, 0.0
    %v1026 = vadd.f32 %v994, 0.0
    %v1027 = vadd.f32 %v995, 0.0
    %v1028 = vadd.f32 %v996, 0.0
    %v1029 = vadd.f32 %v997, 0.0
    %v1030 = vadd.f32 %v998, 0.0
    %v1031 = vadd.f32 %v999, 0.0
    %v1032 = vadd.f32 %v1000, 0.0
    %v1033 = vadd.f32 %v1001, 0.0
    %v1034 = vadd.f32 %v1002, 0.0
    %v1035 = vadd.f32 %v1003, 0.0
    %v1036 = vadd.f32 %v1004, 0.0
    %v1037 = vadd.f32 %v1005, 0.0
    %v1038 = vadd.f32 %v1006, 0.0
    %v1039 = vadd.f32 %v1007, 0.0
    %s1040 = scalar_lea.vmem %s6, 64
    %v1041 = vld [vmem:[%s1040] sm:$0xff]
    %v1042 = vld [vmem:[%s1040 + $0x8] sm:$0xff]
    %v1043 = vld [vmem:[%s1040 + $0x10] sm:$0xff]
    %v1044 = vld [vmem:[%s1040 + $0x18] sm:$0xff]
    %v1045 = vld [vmem:[%s1040 + $0x20] sm:$0xff]
    %v1046 = vld [vmem:[%s1040 + $0x28] sm:$0xff]
    %v1047 = vld [vmem:[%s1040 + $0x30] sm:$0xff]
    %v1048 = vld [vmem:[%s1040 + $0x38] sm:$0xff]
    %s1049 = scalar_lea.vmem %s7, 2
    %v1050 = vld [vmem:[%s1049] sm:$0x3]
    %v1052 = vlaneseq
    %v1053 = vshrl.u32 %v1052, 7
    %v1054 = vsub.s32 0, %v1053
    %v1055 = vrot.slane %v1050, %v1054
    %v1056 = vlaneseq
    %v1057 = vshrl.u32 %v1056, 7
    %v1058 = vsub.s32 1, %v1057
    %v1059 = vrot.slane %v1050, %v1058
    %1062 = vmatprep.subr.mxu0 0.0
    %1063 = vmatpush1.msra.mxu0 0.0
    %1064 = vmatprep.subr.mxu0 0.0
    %1065 = vmatpush1.msra.mxu0 0.0
    %1066 = vmatprep.subr.mxu0 0.0
    %1067 = vmatpush1.msra.mxu0 0.0
    %1068 = vmatprep.subr.mxu0 0.0
    %1069 = vmatpush1.msra.mxu0 0.0
    %1070 = vmatprep.subr.mxu0 0.0
    %1071 = vmatpush1.msra.mxu0 0.0
    %1072 = vmatprep.subr.mxu0 0.0
    %1073 = vmatpush1.msra.mxu0 0.0
    %1074 = vmatprep.subr.mxu0 0.0
    %1075 = vmatpush1.msra.mxu0 0.0
    %1076 = vmatprep.subr.mxu0 0.0
    %1077 = vmatpush1.msra.mxu0 0.0
    %1078 = vmatprep.subr.mxu0 0.0
    %1079 = vmatpush1.msra.mxu0 0.0
    %1080 = vmatprep.subr.mxu0 0.0
    %1081 = vmatpush1.msra.mxu0 0.0
    %1082 = vmatprep.subr.mxu0 0.0
    %1083 = vmatpush1.msra.mxu0 0.0
    %1084 = vmatprep.subr.mxu0 0.0
    %1085 = vmatpush1.msra.mxu0 0.0
    %1086 = vmatprep.subr.mxu0 %v1048
    %1087 = vmatpush1.msra.mxu0 %v1047
    %1088 = vmatprep.subr.mxu0 %v1046
    %1089 = vmatpush1.msra.mxu0 %v1045
    %1090 = vmatprep.subr.mxu0 %v1044
    %1091 = vmatpush1.msra.mxu0 %v1043
    %1092 = vmatprep.subr.mxu0 %v1042
    %1093 = vmatpush1.msra.mxu0 %v1041
    %1094 = vmatprep.subr.mxu0 0.0
    %1095 = vmatpush2.msra.mxu0 0.0
    %1096 = vmatprep.subr.mxu0 0.0
    %1097 = vmatpush2.msra.mxu0 0.0
    %1098 = vmatprep.subr.mxu0 0.0
    %1099 = vmatpush2.msra.mxu0 0.0
    %1100 = vmatprep.subr.mxu0 0.0
    %1101 = vmatpush2.msra.mxu0 0.0
    %1102 = vmatprep.subr.mxu0 0.0
    %1103 = vmatpush2.msra.mxu0 0.0
    %1104 = vmatprep.subr.mxu0 0.0
    %1105 = vmatpush2.msra.mxu0 0.0
    %1106 = vmatprep.subr.mxu0 0.0
    %1107 = vmatpush2.msra.mxu0 0.0
    %1108 = vmatprep.subr.mxu0 0.0
    %1109 = vmatpush2.msra.mxu0 0.0
    %1110 = vmatprep.subr.mxu0 0.0
    %1111 = vmatpush2.msra.mxu0 0.0
    %1112 = vmatprep.subr.mxu0 0.0
    %1113 = vmatpush2.msra.mxu0 0.0
    %1114 = vmatprep.subr.mxu0 0.0
    %1115 = vmatpush2.msra.mxu0 0.0
    %1116 = vmatprep.subr.mxu0 0.0
    %1117 = vmatpush2.msra.mxu0 0.0
    %1118 = vmatprep.subr.mxu0 0.0
    %1119 = vmatpush2.msra.mxu0 0.0
    %1120 = vmatprep.subr.mxu0 0.0
    %1121 = vmatpush2.msra.mxu0 0.0
    %1122 = vmatprep.subr.mxu0 0.0
    %1123 = vmatpush2.msra.mxu0 0.0
    %1124 = vmatprep.subr.mxu0 0.0
    %1125 = vmatpush2.msra.mxu0 0.0
    %1126 = vmatprep.mubr.f32.mxu0 0.0
    %1127 = vmatmul.mubr.f32.gmra.mxu0 %v543
    %v1128 = vpop.f32.mrf.mxu0
    %v1129 = vadd.f32 %v1055, %v1128
    %v1130 = vpop.f32.mrf.mxu0
    %v1131 = vadd.f32 %v1059, %v1130
    %1132 = vmatprep.mubr.f32.mxu0 0.0
    %1133 = vmatmul.mubr.f32.gmra.mxu0 %v546
    %v1134 = vpop.f32.mrf.mxu0
    %v1135 = vadd.f32 %v1055, %v1134
    %v1136 = vpop.f32.mrf.mxu0
    %v1137 = vadd.f32 %v1059, %v1136
    %1138 = vmatprep.mubr.f32.mxu0 0.0
    %1139 = vmatmul.mubr.f32.gmra.mxu0 %v549
    %v1140 = vpop.f32.mrf.mxu0
    %v1141 = vadd.f32 %v1055, %v1140
    %v1142 = vpop.f32.mrf.mxu0
    %v1143 = vadd.f32 %v1059, %v1142
    %1144 = vmatprep.mubr.f32.mxu0 0.0
    %1145 = vmatmul.mubr.f32.gmra.mxu0 %v552
    %v1146 = vpop.f32.mrf.mxu0
    %v1147 = vadd.f32 %v1055, %v1146
    %v1148 = vpop.f32.mrf.mxu0
    %v1149 = vadd.f32 %v1059, %v1148
    %1150 = vmatprep.mubr.f32.mxu0 0.0
    %1151 = vmatmul.mubr.f32.gmra.mxu0 %v555
    %v1152 = vpop.f32.mrf.mxu0
    %v1153 = vadd.f32 %v1055, %v1152
    %v1154 = vpop.f32.mrf.mxu0
    %v1155 = vadd.f32 %v1059, %v1154
    %1156 = vmatprep.mubr.f32.mxu0 0.0
    %1157 = vmatmul.mubr.f32.gmra.mxu0 %v558
    %v1158 = vpop.f32.mrf.mxu0
    %v1159 = vadd.f32 %v1055, %v1158
    %v1160 = vpop.f32.mrf.mxu0
    %v1161 = vadd.f32 %v1059, %v1160
    %1162 = vmatprep.mubr.f32.mxu0 0.0
    %1163 = vmatmul.mubr.f32.gmra.mxu0 %v561
    %v1164 = vpop.f32.mrf.mxu0
    %v1165 = vadd.f32 %v1055, %v1164
    %v1166 = vpop.f32.mrf.mxu0
    %v1167 = vadd.f32 %v1059, %v1166
    %1168 = vmatprep.mubr.f32.mxu0 0.0
    %1169 = vmatmul.mubr.f32.gmra.mxu0 %v564
    %v1170 = vpop.f32.mrf.mxu0
    %v1171 = vadd.f32 %v1055, %v1170
    %v1172 = vpop.f32.mrf.mxu0
    %v1173 = vadd.f32 %v1059, %v1172
    %1174 = vmatprep.mubr.f32.mxu0 0.0
    %1175 = vmatmul.mubr.f32.gmra.mxu0 %v567
    %v1176 = vpop.f32.mrf.mxu0
    %v1177 = vadd.f32 %v1055, %v1176
    %v1178 = vpop.f32.mrf.mxu0
    %v1179 = vadd.f32 %v1059, %v1178
    %1180 = vmatprep.mubr.f32.mxu0 0.0
    %1181 = vmatmul.mubr.f32.gmra.mxu0 %v570
    %v1182 = vpop.f32.mrf.mxu0
    %v1183 = vadd.f32 %v1055, %v1182
    %v1184 = vpop.f32.mrf.mxu0
    %v1185 = vadd.f32 %v1059, %v1184
    %1186 = vmatprep.mubr.f32.mxu0 0.0
    %1187 = vmatmul.mubr.f32.gmra.mxu0 %v573
    %v1188 = vpop.f32.mrf.mxu0
    %v1189 = vadd.f32 %v1055, %v1188
    %v1190 = vpop.f32.mrf.mxu0
    %v1191 = vadd.f32 %v1059, %v1190
    %1192 = vmatprep.mubr.f32.mxu0 0.0
    %1193 = vmatmul.mubr.f32.gmra.mxu0 %v576
    %v1194 = vpop.f32.mrf.mxu0
    %v1195 = vadd.f32 %v1055, %v1194
    %v1196 = vpop.f32.mrf.mxu0
    %v1197 = vadd.f32 %v1059, %v1196
    %1198 = vmatprep.mubr.f32.mxu0 0.0
    %1199 = vmatmul.mubr.f32.gmra.mxu0 %v579
    %v1200 = vpop.f32.mrf.mxu0
    %v1201 = vadd.f32 %v1055, %v1200
    %v1202 = vpop.f32.mrf.mxu0
    %v1203 = vadd.f32 %v1059, %v1202
    %1204 = vmatprep.mubr.f32.mxu0 0.0
    %1205 = vmatmul.mubr.f32.gmra.mxu0 %v582
    %v1206 = vpop.f32.mrf.mxu0
    %v1207 = vadd.f32 %v1055, %v1206
    %v1208 = vpop.f32.mrf.mxu0
    %v1209 = vadd.f32 %v1059, %v1208
    %1210 = vmatprep.mubr.f32.mxu0 0.0
    %1211 = vmatmul.mubr.f32.gmra.mxu0 %v585
    %v1212 = vpop.f32.mrf.mxu0
    %v1213 = vadd.f32 %v1055, %v1212
    %v1214 = vpop.f32.mrf.mxu0
    %v1215 = vadd.f32 %v1059, %v1214
    %1216 = vmatprep.mubr.f32.mxu0 0.0
    %1217 = vmatmul.mubr.f32.gmra.mxu0 %v588
    %v1218 = vpop.f32.mrf.mxu0
    %v1219 = vadd.f32 %v1055, %v1218
    %v1220 = vpop.f32.mrf.mxu0
    %v1221 = vadd.f32 %v1059, %v1220
    %1222 = vdwg.mxu0
    %s1223 = scalar_lea.vmem [#allocation2], 64
    %v1224 = vld [vmem:[%s1223] sm:$0xff]
    %v1225 = vld [vmem:[%s1223 + $0x8] sm:$0xff]
    %v1226 = vld [vmem:[%s1223 + $0x10] sm:$0xff]
    %v1227 = vld [vmem:[%s1223 + $0x18] sm:$0xff]
    %v1228 = vld [vmem:[%s1223 + $0x20] sm:$0xff]
    %v1229 = vld [vmem:[%s1223 + $0x28] sm:$0xff]
    %v1230 = vld [vmem:[%s1223 + $0x30] sm:$0x7]
    %v1231 = vld [vmem:[%s1223 + $0x38] sm:$0x7]
    %v1233 = vsel %vm808, %v1230, 0
    %v1236 = vsel %vm808, %v1231, 0
    %1238 = vmatprep.subr.mxu0 0.0
    %1239 = vmatpush1.msra.mxu0 0.0
    %1240 = vmatprep.subr.mxu0 0.0
    %1241 = vmatpush1.msra.mxu0 0.0
    %1242 = vmatprep.subr.mxu0 0.0
    %1243 = vmatpush1.msra.mxu0 0.0
    %1244 = vmatprep.subr.mxu0 0.0
    %1245 = vmatpush1.msra.mxu0 0.0
    %1246 = vmatprep.subr.mxu0 0.0
    %1247 = vmatpush1.msra.mxu0 0.0
    %1248 = vmatprep.subr.mxu0 0.0
    %1249 = vmatpush1.msra.mxu0 0.0
    %1250 = vmatprep.subr.mxu0 0.0
    %1251 = vmatpush1.msra.mxu0 0.0
    %1252 = vmatprep.subr.mxu0 0.0
    %1253 = vmatpush1.msra.mxu0 0.0
    %1254 = vmatprep.subr.mxu0 0.0
    %1255 = vmatpush1.msra.mxu0 0.0
    %1256 = vmatprep.subr.mxu0 0.0
    %1257 = vmatpush1.msra.mxu0 0.0
    %1258 = vmatprep.subr.mxu0 0.0
    %1259 = vmatpush1.msra.mxu0 0.0
    %1260 = vmatprep.subr.mxu0 0.0
    %1261 = vmatpush1.msra.mxu0 0.0
    %1262 = vmatprep.subr.mxu0 %v1236
    %1263 = vmatpush1.msra.mxu0 %v1233
    %1264 = vmatprep.subr.mxu0 %v1229
    %1265 = vmatpush1.msra.mxu0 %v1228
    %1266 = vmatprep.subr.mxu0 %v1227
    %1267 = vmatpush1.msra.mxu0 %v1226
    %1268 = vmatprep.subr.mxu0 %v1225
    %1269 = vmatpush1.msra.mxu0 %v1224
    %1270 = vmatprep.subr.mxu0 0.0
    %1271 = vmatpush2.msra.mxu0 0.0
    %1272 = vmatprep.subr.mxu0 0.0
    %1273 = vmatpush2.msra.mxu0 0.0
    %1274 = vmatprep.subr.mxu0 0.0
    %1275 = vmatpush2.msra.mxu0 0.0
    %1276 = vmatprep.subr.mxu0 0.0
    %1277 = vmatpush2.msra.mxu0 0.0
    %1278 = vmatprep.subr.mxu0 0.0
    %1279 = vmatpush2.msra.mxu0 0.0
    %1280 = vmatprep.subr.mxu0 0.0
    %1281 = vmatpush2.msra.mxu0 0.0
    %1282 = vmatprep.subr.mxu0 0.0
    %1283 = vmatpush2.msra.mxu0 0.0
    %1284 = vmatprep.subr.mxu0 0.0
    %1285 = vmatpush2.msra.mxu0 0.0
    %1286 = vmatprep.subr.mxu0 0.0
    %1287 = vmatpush2.msra.mxu0 0.0
    %1288 = vmatprep.subr.mxu0 0.0
    %1289 = vmatpush2.msra.mxu0 0.0
    %1290 = vmatprep.subr.mxu0 0.0
    %1291 = vmatpush2.msra.mxu0 0.0
    %1292 = vmatprep.subr.mxu0 0.0
    %1293 = vmatpush2.msra.mxu0 0.0
    %1294 = vmatprep.subr.mxu0 0.0
    %1295 = vmatpush2.msra.mxu0 0.0
    %1296 = vmatprep.subr.mxu0 0.0
    %1297 = vmatpush2.msra.mxu0 0.0
    %1298 = vmatprep.subr.mxu0 0.0
    %1299 = vmatpush2.msra.mxu0 0.0
    %1300 = vmatprep.subr.mxu0 0.0
    %1301 = vmatpush2.msra.mxu0 0.0
    %1302 = vmatprep.mubr.f32.mxu0 0.0
    %1303 = vmatmul.mubr.f32.gmra.mxu0 %v761
    %v1304 = vpop.f32.mrf.mxu0
    %v1305 = vadd.f32 0.0, %v1304
    %v1306 = vpop.f32.mrf.mxu0
    %v1307 = vadd.f32 0.0, %v1306
    %1308 = vmatprep.mubr.f32.mxu0 0.0
    %1309 = vmatmul.mubr.f32.gmra.mxu0 %v764
    %v1310 = vpop.f32.mrf.mxu0
    %v1311 = vadd.f32 0.0, %v1310
    %v1312 = vpop.f32.mrf.mxu0
    %v1313 = vadd.f32 0.0, %v1312
    %1314 = vmatprep.mubr.f32.mxu0 0.0
    %1315 = vmatmul.mubr.f32.gmra.mxu0 %v767
    %v1316 = vpop.f32.mrf.mxu0
    %v1317 = vadd.f32 0.0, %v1316
    %v1318 = vpop.f32.mrf.mxu0
    %v1319 = vadd.f32 0.0, %v1318
    %1320 = vmatprep.mubr.f32.mxu0 0.0
    %1321 = vmatmul.mubr.f32.gmra.mxu0 %v770
    %v1322 = vpop.f32.mrf.mxu0
    %v1323 = vadd.f32 0.0, %v1322
    %v1324 = vpop.f32.mrf.mxu0
    %v1325 = vadd.f32 0.0, %v1324
    %1326 = vmatprep.mubr.f32.mxu0 0.0
    %1327 = vmatmul.mubr.f32.gmra.mxu0 %v773
    %v1328 = vpop.f32.mrf.mxu0
    %v1329 = vadd.f32 0.0, %v1328
    %v1330 = vpop.f32.mrf.mxu0
    %v1331 = vadd.f32 0.0, %v1330
    %1332 = vmatprep.mubr.f32.mxu0 0.0
    %1333 = vmatmul.mubr.f32.gmra.mxu0 %v776
    %v1334 = vpop.f32.mrf.mxu0
    %v1335 = vadd.f32 0.0, %v1334
    %v1336 = vpop.f32.mrf.mxu0
    %v1337 = vadd.f32 0.0, %v1336
    %1338 = vmatprep.mubr.f32.mxu0 0.0
    %1339 = vmatmul.mubr.f32.gmra.mxu0 %v779
    %v1340 = vpop.f32.mrf.mxu0
    %v1341 = vadd.f32 0.0, %v1340
    %v1342 = vpop.f32.mrf.mxu0
    %v1343 = vadd.f32 0.0, %v1342
    %1344 = vmatprep.mubr.f32.mxu0 0.0
    %1345 = vmatmul.mubr.f32.gmra.mxu0 %v782
    %v1346 = vpop.f32.mrf.mxu0
    %v1347 = vadd.f32 0.0, %v1346
    %v1348 = vpop.f32.mrf.mxu0
    %v1349 = vadd.f32 0.0, %v1348
    %1350 = vmatprep.mubr.f32.mxu0 0.0
    %1351 = vmatmul.mubr.f32.gmra.mxu0 %v785
    %v1352 = vpop.f32.mrf.mxu0
    %v1353 = vadd.f32 0.0, %v1352
    %v1354 = vpop.f32.mrf.mxu0
    %v1355 = vadd.f32 0.0, %v1354
    %1356 = vmatprep.mubr.f32.mxu0 0.0
    %1357 = vmatmul.mubr.f32.gmra.mxu0 %v788
    %v1358 = vpop.f32.mrf.mxu0
    %v1359 = vadd.f32 0.0, %v1358
    %v1360 = vpop.f32.mrf.mxu0
    %v1361 = vadd.f32 0.0, %v1360
    %1362 = vmatprep.mubr.f32.mxu0 0.0
    %1363 = vmatmul.mubr.f32.gmra.mxu0 %v791
    %v1364 = vpop.f32.mrf.mxu0
    %v1365 = vadd.f32 0.0, %v1364
    %v1366 = vpop.f32.mrf.mxu0
    %v1367 = vadd.f32 0.0, %v1366
    %1368 = vmatprep.mubr.f32.mxu0 0.0
    %1369 = vmatmul.mubr.f32.gmra.mxu0 %v794
    %v1370 = vpop.f32.mrf.mxu0
    %v1371 = vadd.f32 0.0, %v1370
    %v1372 = vpop.f32.mrf.mxu0
    %v1373 = vadd.f32 0.0, %v1372
    %1374 = vmatprep.mubr.f32.mxu0 0.0
    %1375 = vmatmul.mubr.f32.gmra.mxu0 %v797
    %v1376 = vpop.f32.mrf.mxu0
    %v1377 = vadd.f32 0.0, %v1376
    %v1378 = vpop.f32.mrf.mxu0
    %v1379 = vadd.f32 0.0, %v1378
    %1380 = vmatprep.mubr.f32.mxu0 0.0
    %1381 = vmatmul.mubr.f32.gmra.mxu0 %v800
    %v1382 = vpop.f32.mrf.mxu0
    %v1383 = vadd.f32 0.0, %v1382
    %v1384 = vpop.f32.mrf.mxu0
    %v1385 = vadd.f32 0.0, %v1384
    %1386 = vmatprep.mubr.f32.mxu0 0.0
    %1387 = vmatmul.mubr.f32.gmra.mxu0 %v803
    %v1388 = vpop.f32.mrf.mxu0
    %v1389 = vadd.f32 0.0, %v1388
    %v1390 = vpop.f32.mrf.mxu0
    %v1391 = vadd.f32 0.0, %v1390
    %1392 = vmatprep.mubr.f32.mxu0 0.0
    %1393 = vmatmul.mubr.f32.gmra.mxu0 %v806
    %v1394 = vpop.f32.mrf.mxu0
    %v1395 = vadd.f32 0.0, %v1394
    %v1396 = vpop.f32.mrf.mxu0
    %v1397 = vadd.f32 0.0, %v1396
    %1398 = vdwg.mxu0
    %v1399 = vmul.f32 %v1129, %v1305
    %v1400 = vmul.f32 %v1131, %v1307
    %v1401 = vmul.f32 %v1135, %v1311
    %v1402 = vmul.f32 %v1137, %v1313
    %v1403 = vmul.f32 %v1141, %v1317
    %v1404 = vmul.f32 %v1143, %v1319
    %v1405 = vmul.f32 %v1147, %v1323
    %v1406 = vmul.f32 %v1149, %v1325
    %v1407 = vmul.f32 %v1153, %v1329
    %v1408 = vmul.f32 %v1155, %v1331
    %v1409 = vmul.f32 %v1159, %v1335
    %v1410 = vmul.f32 %v1161, %v1337
    %v1411 = vmul.f32 %v1165, %v1341
    %v1412 = vmul.f32 %v1167, %v1343
    %v1413 = vmul.f32 %v1171, %v1347
    %v1414 = vmul.f32 %v1173, %v1349
    %v1415 = vmul.f32 %v1177, %v1353
    %v1416 = vmul.f32 %v1179, %v1355
    %v1417 = vmul.f32 %v1183, %v1359
    %v1418 = vmul.f32 %v1185, %v1361
    %v1419 = vmul.f32 %v1189, %v1365
    %v1420 = vmul.f32 %v1191, %v1367
    %v1421 = vmul.f32 %v1195, %v1371
    %v1422 = vmul.f32 %v1197, %v1373
    %v1423 = vmul.f32 %v1201, %v1377
    %v1424 = vmul.f32 %v1203, %v1379
    %v1425 = vmul.f32 %v1207, %v1383
    %v1426 = vmul.f32 %v1209, %v1385
    %v1427 = vmul.f32 %v1213, %v1389
    %v1428 = vmul.f32 %v1215, %v1391
    %v1429 = vmul.f32 %v1219, %v1395
    %v1430 = vmul.f32 %v1221, %v1397
    %v1431 = vadd.f32 %v1008, %v1399
    %v1432 = vadd.f32 %v1009, %v1400
    %v1433 = vadd.f32 %v1010, %v1401
    %v1434 = vadd.f32 %v1011, %v1402
    %v1435 = vadd.f32 %v1012, %v1403
    %v1436 = vadd.f32 %v1013, %v1404
    %v1437 = vadd.f32 %v1014, %v1405
    %v1438 = vadd.f32 %v1015, %v1406
    %v1439 = vadd.f32 %v1016, %v1407
    %v1440 = vadd.f32 %v1017, %v1408
    %v1441 = vadd.f32 %v1018, %v1409
    %v1442 = vadd.f32 %v1019, %v1410
    %v1443 = vadd.f32 %v1020, %v1411
    %v1444 = vadd.f32 %v1021, %v1412
    %v1445 = vadd.f32 %v1022, %v1413
    %v1446 = vadd.f32 %v1023, %v1414
    %v1447 = vadd.f32 %v1024, %v1415
    %v1448 = vadd.f32 %v1025, %v1416
    %v1449 = vadd.f32 %v1026, %v1417
    %v1450 = vadd.f32 %v1027, %v1418
    %v1451 = vadd.f32 %v1028, %v1419
    %v1452 = vadd.f32 %v1029, %v1420
    %v1453 = vadd.f32 %v1030, %v1421
    %v1454 = vadd.f32 %v1031, %v1422
    %v1455 = vadd.f32 %v1032, %v1423
    %v1456 = vadd.f32 %v1033, %v1424
    %v1457 = vadd.f32 %v1034, %v1425
    %v1458 = vadd.f32 %v1035, %v1426
    %v1459 = vadd.f32 %v1036, %v1427
    %v1460 = vadd.f32 %v1037, %v1428
    %v1461 = vadd.f32 %v1038, %v1429
    %v1462 = vadd.f32 %v1039, %v1430
    %s1463 = scalar_lea.vmem %s6, 128
    %v1464 = vld [vmem:[%s1463] sm:$0xff]
    %v1465 = vld [vmem:[%s1463 + $0x8] sm:$0xff]
    %v1466 = vld [vmem:[%s1463 + $0x10] sm:$0xff]
    %v1467 = vld [vmem:[%s1463 + $0x18] sm:$0xff]
    %v1468 = vld [vmem:[%s1463 + $0x20] sm:$0xff]
    %v1469 = vld [vmem:[%s1463 + $0x28] sm:$0xff]
    %v1470 = vld [vmem:[%s1463 + $0x30] sm:$0xff]
    %v1471 = vld [vmem:[%s1463 + $0x38] sm:$0xff]
    %s1472 = scalar_lea.vmem %s7, 4
    %v1473 = vld [vmem:[%s1472] sm:$0x3]
    %v1475 = vlaneseq
    %v1476 = vshrl.u32 %v1475, 7
    %v1477 = vsub.s32 0, %v1476
    %v1478 = vrot.slane %v1473, %v1477
    %v1479 = vlaneseq
    %v1480 = vshrl.u32 %v1479, 7
    %v1481 = vsub.s32 1, %v1480
    %v1482 = vrot.slane %v1473, %v1481
    %1485 = vmatprep.subr.mxu0 0.0
    %1486 = vmatpush1.msra.mxu0 0.0
    %1487 = vmatprep.subr.mxu0 0.0
    %1488 = vmatpush1.msra.mxu0 0.0
    %1489 = vmatprep.subr.mxu0 0.0
    %1490 = vmatpush1.msra.mxu0 0.0
    %1491 = vmatprep.subr.mxu0 0.0
    %1492 = vmatpush1.msra.mxu0 0.0
    %1493 = vmatprep.subr.mxu0 0.0
    %1494 = vmatpush1.msra.mxu0 0.0
    %1495 = vmatprep.subr.mxu0 0.0
    %1496 = vmatpush1.msra.mxu0 0.0
    %1497 = vmatprep.subr.mxu0 0.0
    %1498 = vmatpush1.msra.mxu0 0.0
    %1499 = vmatprep.subr.mxu0 0.0
    %1500 = vmatpush1.msra.mxu0 0.0
    %1501 = vmatprep.subr.mxu0 0.0
    %1502 = vmatpush1.msra.mxu0 0.0
    %1503 = vmatprep.subr.mxu0 0.0
    %1504 = vmatpush1.msra.mxu0 0.0
    %1505 = vmatprep.subr.mxu0 0.0
    %1506 = vmatpush1.msra.mxu0 0.0
    %1507 = vmatprep.subr.mxu0 0.0
    %1508 = vmatpush1.msra.mxu0 0.0
    %1509 = vmatprep.subr.mxu0 %v1471
    %1510 = vmatpush1.msra.mxu0 %v1470
    %1511 = vmatprep.subr.mxu0 %v1469
    %1512 = vmatpush1.msra.mxu0 %v1468
    %1513 = vmatprep.subr.mxu0 %v1467
    %1514 = vmatpush1.msra.mxu0 %v1466
    %1515 = vmatprep.subr.mxu0 %v1465
    %1516 = vmatpush1.msra.mxu0 %v1464
    %1517 = vmatprep.subr.mxu0 0.0
    %1518 = vmatpush2.msra.mxu0 0.0
    %1519 = vmatprep.subr.mxu0 0.0
    %1520 = vmatpush2.msra.mxu0 0.0
    %1521 = vmatprep.subr.mxu0 0.0
    %1522 = vmatpush2.msra.mxu0 0.0
    %1523 = vmatprep.subr.mxu0 0.0
    %1524 = vmatpush2.msra.mxu0 0.0
    %1525 = vmatprep.subr.mxu0 0.0
    %1526 = vmatpush2.msra.mxu0 0.0
    %1527 = vmatprep.subr.mxu0 0.0
    %1528 = vmatpush2.msra.mxu0 0.0
    %1529 = vmatprep.subr.mxu0 0.0
    %1530 = vmatpush2.msra.mxu0 0.0
    %1531 = vmatprep.subr.mxu0 0.0
    %1532 = vmatpush2.msra.mxu0 0.0
    %1533 = vmatprep.subr.mxu0 0.0
    %1534 = vmatpush2.msra.mxu0 0.0
    %1535 = vmatprep.subr.mxu0 0.0
    %1536 = vmatpush2.msra.mxu0 0.0
    %1537 = vmatprep.subr.mxu0 0.0
    %1538 = vmatpush2.msra.mxu0 0.0
    %1539 = vmatprep.subr.mxu0 0.0
    %1540 = vmatpush2.msra.mxu0 0.0
    %1541 = vmatprep.subr.mxu0 0.0
    %1542 = vmatpush2.msra.mxu0 0.0
    %1543 = vmatprep.subr.mxu0 0.0
    %1544 = vmatpush2.msra.mxu0 0.0
    %1545 = vmatprep.subr.mxu0 0.0
    %1546 = vmatpush2.msra.mxu0 0.0
    %1547 = vmatprep.subr.mxu0 0.0
    %1548 = vmatpush2.msra.mxu0 0.0
    %1549 = vmatprep.mubr.f32.mxu0 0.0
    %1550 = vmatmul.mubr.f32.gmra.mxu0 %v543
    %v1551 = vpop.f32.mrf.mxu0
    %v1552 = vadd.f32 %v1478, %v1551
    %v1553 = vpop.f32.mrf.mxu0
    %v1554 = vadd.f32 %v1482, %v1553
    %1555 = vmatprep.mubr.f32.mxu0 0.0
    %1556 = vmatmul.mubr.f32.gmra.mxu0 %v546
    %v1557 = vpop.f32.mrf.mxu0
    %v1558 = vadd.f32 %v1478, %v1557
    %v1559 = vpop.f32.mrf.mxu0
    %v1560 = vadd.f32 %v1482, %v1559
    %1561 = vmatprep.mubr.f32.mxu0 0.0
    %1562 = vmatmul.mubr.f32.gmra.mxu0 %v549
    %v1563 = vpop.f32.mrf.mxu0
    %v1564 = vadd.f32 %v1478, %v1563
    %v1565 = vpop.f32.mrf.mxu0
    %v1566 = vadd.f32 %v1482, %v1565
    %1567 = vmatprep.mubr.f32.mxu0 0.0
    %1568 = vmatmul.mubr.f32.gmra.mxu0 %v552
    %v1569 = vpop.f32.mrf.mxu0
    %v1570 = vadd.f32 %v1478, %v1569
    %v1571 = vpop.f32.mrf.mxu0
    %v1572 = vadd.f32 %v1482, %v1571
    %1573 = vmatprep.mubr.f32.mxu0 0.0
    %1574 = vmatmul.mubr.f32.gmra.mxu0 %v555
    %v1575 = vpop.f32.mrf.mxu0
    %v1576 = vadd.f32 %v1478, %v1575
    %v1577 = vpop.f32.mrf.mxu0
    %v1578 = vadd.f32 %v1482, %v1577
    %1579 = vmatprep.mubr.f32.mxu0 0.0
    %1580 = vmatmul.mubr.f32.gmra.mxu0 %v558
    %v1581 = vpop.f32.mrf.mxu0
    %v1582 = vadd.f32 %v1478, %v1581
    %v1583 = vpop.f32.mrf.mxu0
    %v1584 = vadd.f32 %v1482, %v1583
    %1585 = vmatprep.mubr.f32.mxu0 0.0
    %1586 = vmatmul.mubr.f32.gmra.mxu0 %v561
    %v1587 = vpop.f32.mrf.mxu0
    %v1588 = vadd.f32 %v1478, %v1587
    %v1589 = vpop.f32.mrf.mxu0
    %v1590 = vadd.f32 %v1482, %v1589
    %1591 = vmatprep.mubr.f32.mxu0 0.0
    %1592 = vmatmul.mubr.f32.gmra.mxu0 %v564
    %v1593 = vpop.f32.mrf.mxu0
    %v1594 = vadd.f32 %v1478, %v1593
    %v1595 = vpop.f32.mrf.mxu0
    %v1596 = vadd.f32 %v1482, %v1595
    %1597 = vmatprep.mubr.f32.mxu0 0.0
    %1598 = vmatmul.mubr.f32.gmra.mxu0 %v567
    %v1599 = vpop.f32.mrf.mxu0
    %v1600 = vadd.f32 %v1478, %v1599
    %v1601 = vpop.f32.mrf.mxu0
    %v1602 = vadd.f32 %v1482, %v1601
    %1603 = vmatprep.mubr.f32.mxu0 0.0
    %1604 = vmatmul.mubr.f32.gmra.mxu0 %v570
    %v1605 = vpop.f32.mrf.mxu0
    %v1606 = vadd.f32 %v1478, %v1605
    %v1607 = vpop.f32.mrf.mxu0
    %v1608 = vadd.f32 %v1482, %v1607
    %1609 = vmatprep.mubr.f32.mxu0 0.0
    %1610 = vmatmul.mubr.f32.gmra.mxu0 %v573
    %v1611 = vpop.f32.mrf.mxu0
    %v1612 = vadd.f32 %v1478, %v1611
    %v1613 = vpop.f32.mrf.mxu0
    %v1614 = vadd.f32 %v1482, %v1613
    %1615 = vmatprep.mubr.f32.mxu0 0.0
    %1616 = vmatmul.mubr.f32.gmra.mxu0 %v576
    %v1617 = vpop.f32.mrf.mxu0
    %v1618 = vadd.f32 %v1478, %v1617
    %v1619 = vpop.f32.mrf.mxu0
    %v1620 = vadd.f32 %v1482, %v1619
    %1621 = vmatprep.mubr.f32.mxu0 0.0
    %1622 = vmatmul.mubr.f32.gmra.mxu0 %v579
    %v1623 = vpop.f32.mrf.mxu0
    %v1624 = vadd.f32 %v1478, %v1623
    %v1625 = vpop.f32.mrf.mxu0
    %v1626 = vadd.f32 %v1482, %v1625
    %1627 = vmatprep.mubr.f32.mxu0 0.0
    %1628 = vmatmul.mubr.f32.gmra.mxu0 %v582
    %v1629 = vpop.f32.mrf.mxu0
    %v1630 = vadd.f32 %v1478, %v1629
    %v1631 = vpop.f32.mrf.mxu0
    %v1632 = vadd.f32 %v1482, %v1631
    %1633 = vmatprep.mubr.f32.mxu0 0.0
    %1634 = vmatmul.mubr.f32.gmra.mxu0 %v585
    %v1635 = vpop.f32.mrf.mxu0
    %v1636 = vadd.f32 %v1478, %v1635
    %v1637 = vpop.f32.mrf.mxu0
    %v1638 = vadd.f32 %v1482, %v1637
    %1639 = vmatprep.mubr.f32.mxu0 0.0
    %1640 = vmatmul.mubr.f32.gmra.mxu0 %v588
    %v1641 = vpop.f32.mrf.mxu0
    %v1642 = vadd.f32 %v1478, %v1641
    %v1643 = vpop.f32.mrf.mxu0
    %v1644 = vadd.f32 %v1482, %v1643
    %1645 = vdwg.mxu0
    %s1646 = scalar_lea.vmem [#allocation2], 128
    %v1647 = vld [vmem:[%s1646] sm:$0xff]
    %v1648 = vld [vmem:[%s1646 + $0x8] sm:$0xff]
    %v1649 = vld [vmem:[%s1646 + $0x10] sm:$0xff]
    %v1650 = vld [vmem:[%s1646 + $0x18] sm:$0xff]
    %v1651 = vld [vmem:[%s1646 + $0x20] sm:$0xff]
    %v1652 = vld [vmem:[%s1646 + $0x28] sm:$0xff]
    %v1653 = vld [vmem:[%s1646 + $0x30] sm:$0x7]
    %v1654 = vld [vmem:[%s1646 + $0x38] sm:$0x7]
    %v1656 = vsel %vm808, %v1653, 0
    %v1659 = vsel %vm808, %v1654, 0
    %1661 = vmatprep.subr.mxu0 0.0
    %1662 = vmatpush1.msra.mxu0 0.0
    %1663 = vmatprep.subr.mxu0 0.0
    %1664 = vmatpush1.msra.mxu0 0.0
    %1665 = vmatprep.subr.mxu0 0.0
    %1666 = vmatpush1.msra.mxu0 0.0
    %1667 = vmatprep.subr.mxu0 0.0
    %1668 = vmatpush1.msra.mxu0 0.0
    %1669 = vmatprep.subr.mxu0 0.0
    %1670 = vmatpush1.msra.mxu0 0.0
    %1671 = vmatprep.subr.mxu0 0.0
    %1672 = vmatpush1.msra.mxu0 0.0
    %1673 = vmatprep.subr.mxu0 0.0
    %1674 = vmatpush1.msra.mxu0 0.0
    %1675 = vmatprep.subr.mxu0 0.0
    %1676 = vmatpush1.msra.mxu0 0.0
    %1677 = vmatprep.subr.mxu0 0.0
    %1678 = vmatpush1.msra.mxu0 0.0
    %1679 = vmatprep.subr.mxu0 0.0
    %1680 = vmatpush1.msra.mxu0 0.0
    %1681 = vmatprep.subr.mxu0 0.0
    %1682 = vmatpush1.msra.mxu0 0.0
    %1683 = vmatprep.subr.mxu0 0.0
    %1684 = vmatpush1.msra.mxu0 0.0
    %1685 = vmatprep.subr.mxu0 %v1659
    %1686 = vmatpush1.msra.mxu0 %v1656
    %1687 = vmatprep.subr.mxu0 %v1652
    %1688 = vmatpush1.msra.mxu0 %v1651
    %1689 = vmatprep.subr.mxu0 %v1650
    %1690 = vmatpush1.msra.mxu0 %v1649
    %1691 = vmatprep.subr.mxu0 %v1648
    %1692 = vmatpush1.msra.mxu0 %v1647
    %1693 = vmatprep.subr.mxu0 0.0
    %1694 = vmatpush2.msra.mxu0 0.0
    %1695 = vmatprep.subr.mxu0 0.0
    %1696 = vmatpush2.msra.mxu0 0.0
    %1697 = vmatprep.subr.mxu0 0.0
    %1698 = vmatpush2.msra.mxu0 0.0
    %1699 = vmatprep.subr.mxu0 0.0
    %1700 = vmatpush2.msra.mxu0 0.0
    %1701 = vmatprep.subr.mxu0 0.0
    %1702 = vmatpush2.msra.mxu0 0.0
    %1703 = vmatprep.subr.mxu0 0.0
    %1704 = vmatpush2.msra.mxu0 0.0
    %1705 = vmatprep.subr.mxu0 0.0
    %1706 = vmatpush2.msra.mxu0 0.0
    %1707 = vmatprep.subr.mxu0 0.0
    %1708 = vmatpush2.msra.mxu0 0.0
    %1709 = vmatprep.subr.mxu0 0.0
    %1710 = vmatpush2.msra.mxu0 0.0
    %1711 = vmatprep.subr.mxu0 0.0
    %1712 = vmatpush2.msra.mxu0 0.0
    %1713 = vmatprep.subr.mxu0 0.0
    %1714 = vmatpush2.msra.mxu0 0.0
    %1715 = vmatprep.subr.mxu0 0.0
    %1716 = vmatpush2.msra.mxu0 0.0
    %1717 = vmatprep.subr.mxu0 0.0
    %1718 = vmatpush2.msra.mxu0 0.0
    %1719 = vmatprep.subr.mxu0 0.0
    %1720 = vmatpush2.msra.mxu0 0.0
    %1721 = vmatprep.subr.mxu0 0.0
    %1722 = vmatpush2.msra.mxu0 0.0
    %1723 = vmatprep.subr.mxu0 0.0
    %1724 = vmatpush2.msra.mxu0 0.0
    %1725 = vmatprep.mubr.f32.mxu0 0.0
    %1726 = vmatmul.mubr.f32.gmra.mxu0 %v761
    %v1727 = vpop.f32.mrf.mxu0
    %v1728 = vadd.f32 0.0, %v1727
    %v1729 = vpop.f32.mrf.mxu0
    %v1730 = vadd.f32 0.0, %v1729
    %1731 = vmatprep.mubr.f32.mxu0 0.0
    %1732 = vmatmul.mubr.f32.gmra.mxu0 %v764
    %v1733 = vpop.f32.mrf.mxu0
    %v1734 = vadd.f32 0.0, %v1733
    %v1735 = vpop.f32.mrf.mxu0
    %v1736 = vadd.f32 0.0, %v1735
    %1737 = vmatprep.mubr.f32.mxu0 0.0
    %1738 = vmatmul.mubr.f32.gmra.mxu0 %v767
    %v1739 = vpop.f32.mrf.mxu0
    %v1740 = vadd.f32 0.0, %v1739
    %v1741 = vpop.f32.mrf.mxu0
    %v1742 = vadd.f32 0.0, %v1741
    %1743 = vmatprep.mubr.f32.mxu0 0.0
    %1744 = vmatmul.mubr.f32.gmra.mxu0 %v770
    %v1745 = vpop.f32.mrf.mxu0
    %v1746 = vadd.f32 0.0, %v1745
    %v1747 = vpop.f32.mrf.mxu0
    %v1748 = vadd.f32 0.0, %v1747
    %1749 = vmatprep.mubr.f32.mxu0 0.0
    %1750 = vmatmul.mubr.f32.gmra.mxu0 %v773
    %v1751 = vpop.f32.mrf.mxu0
    %v1752 = vadd.f32 0.0, %v1751
    %v1753 = vpop.f32.mrf.mxu0
    %v1754 = vadd.f32 0.0, %v1753
    %1755 = vmatprep.mubr.f32.mxu0 0.0
    %1756 = vmatmul.mubr.f32.gmra.mxu0 %v776
    %v1757 = vpop.f32.mrf.mxu0
    %v1758 = vadd.f32 0.0, %v1757
    %v1759 = vpop.f32.mrf.mxu0
    %v1760 = vadd.f32 0.0, %v1759
    %1761 = vmatprep.mubr.f32.mxu0 0.0
    %1762 = vmatmul.mubr.f32.gmra.mxu0 %v779
    %v1763 = vpop.f32.mrf.mxu0
    %v1764 = vadd.f32 0.0, %v1763
    %v1765 = vpop.f32.mrf.mxu0
    %v1766 = vadd.f32 0.0, %v1765
    %1767 = vmatprep.mubr.f32.mxu0 0.0
    %1768 = vmatmul.mubr.f32.gmra.mxu0 %v782
    %v1769 = vpop.f32.mrf.mxu0
    %v1770 = vadd.f32 0.0, %v1769
    %v1771 = vpop.f32.mrf.mxu0
    %v1772 = vadd.f32 0.0, %v1771
    %1773 = vmatprep.mubr.f32.mxu0 0.0
    %1774 = vmatmul.mubr.f32.gmra.mxu0 %v785
    %v1775 = vpop.f32.mrf.mxu0
    %v1776 = vadd.f32 0.0, %v1775
    %v1777 = vpop.f32.mrf.mxu0
    %v1778 = vadd.f32 0.0, %v1777
    %1779 = vmatprep.mubr.f32.mxu0 0.0
    %1780 = vmatmul.mubr.f32.gmra.mxu0 %v788
    %v1781 = vpop.f32.mrf.mxu0
    %v1782 = vadd.f32 0.0, %v1781
    %v1783 = vpop.f32.mrf.mxu0
    %v1784 = vadd.f32 0.0, %v1783
    %1785 = vmatprep.mubr.f32.mxu0 0.0
    %1786 = vmatmul.mubr.f32.gmra.mxu0 %v791
    %v1787 = vpop.f32.mrf.mxu0
    %v1788 = vadd.f32 0.0, %v1787
    %v1789 = vpop.f32.mrf.mxu0
    %v1790 = vadd.f32 0.0, %v1789
    %1791 = vmatprep.mubr.f32.mxu0 0.0
    %1792 = vmatmul.mubr.f32.gmra.mxu0 %v794
    %v1793 = vpop.f32.mrf.mxu0
    %v1794 = vadd.f32 0.0, %v1793
    %v1795 = vpop.f32.mrf.mxu0
    %v1796 = vadd.f32 0.0, %v1795
    %1797 = vmatprep.mubr.f32.mxu0 0.0
    %1798 = vmatmul.mubr.f32.gmra.mxu0 %v797
    %v1799 = vpop.f32.mrf.mxu0
    %v1800 = vadd.f32 0.0, %v1799
    %v1801 = vpop.f32.mrf.mxu0
    %v1802 = vadd.f32 0.0, %v1801
    %1803 = vmatprep.mubr.f32.mxu0 0.0
    %1804 = vmatmul.mubr.f32.gmra.mxu0 %v800
    %v1805 = vpop.f32.mrf.mxu0
    %v1806 = vadd.f32 0.0, %v1805
    %v1807 = vpop.f32.mrf.mxu0
    %v1808 = vadd.f32 0.0, %v1807
    %1809 = vmatprep.mubr.f32.mxu0 0.0
    %1810 = vmatmul.mubr.f32.gmra.mxu0 %v803
    %v1811 = vpop.f32.mrf.mxu0
    %v1812 = vadd.f32 0.0, %v1811
    %v1813 = vpop.f32.mrf.mxu0
    %v1814 = vadd.f32 0.0, %v1813
    %1815 = vmatprep.mubr.f32.mxu0 0.0
    %1816 = vmatmul.mubr.f32.gmra.mxu0 %v806
    %v1817 = vpop.f32.mrf.mxu0
    %v1818 = vadd.f32 0.0, %v1817
    %v1819 = vpop.f32.mrf.mxu0
    %v1820 = vadd.f32 0.0, %v1819
    %1821 = vdwg.mxu0
    %v1822 = vmul.f32 %v1552, %v1728
    %v1823 = vmul.f32 %v1554, %v1730
    %v1824 = vmul.f32 %v1558, %v1734
    %v1825 = vmul.f32 %v1560, %v1736
    %v1826 = vmul.f32 %v1564, %v1740
    %v1827 = vmul.f32 %v1566, %v1742
    %v1828 = vmul.f32 %v1570, %v1746
    %v1829 = vmul.f32 %v1572, %v1748
    %v1830 = vmul.f32 %v1576, %v1752
    %v1831 = vmul.f32 %v1578, %v1754
    %v1832 = vmul.f32 %v1582, %v1758
    %v1833 = vmul.f32 %v1584, %v1760
    %v1834 = vmul.f32 %v1588, %v1764
    %v1835 = vmul.f32 %v1590, %v1766
    %v1836 = vmul.f32 %v1594, %v1770
    %v1837 = vmul.f32 %v1596, %v1772
    %v1838 = vmul.f32 %v1600, %v1776
    %v1839 = vmul.f32 %v1602, %v1778
    %v1840 = vmul.f32 %v1606, %v1782
    %v1841 = vmul.f32 %v1608, %v1784
    %v1842 = vmul.f32 %v1612, %v1788
    %v1843 = vmul.f32 %v1614, %v1790
    %v1844 = vmul.f32 %v1618, %v1794
    %v1845 = vmul.f32 %v1620, %v1796
    %v1846 = vmul.f32 %v1624, %v1800
    %v1847 = vmul.f32 %v1626, %v1802
    %v1848 = vmul.f32 %v1630, %v1806
    %v1849 = vmul.f32 %v1632, %v1808
    %v1850 = vmul.f32 %v1636, %v1812
    %v1851 = vmul.f32 %v1638, %v1814
    %v1852 = vmul.f32 %v1642, %v1818
    %v1853 = vmul.f32 %v1644, %v1820
    %v1854 = vadd.f32 %v1431, %v1822
    %v1855 = vadd.f32 %v1432, %v1823
    %v1856 = vadd.f32 %v1433, %v1824
    %v1857 = vadd.f32 %v1434, %v1825
    %v1858 = vadd.f32 %v1435, %v1826
    %v1859 = vadd.f32 %v1436, %v1827
    %v1860 = vadd.f32 %v1437, %v1828
    %v1861 = vadd.f32 %v1438, %v1829
    %v1862 = vadd.f32 %v1439, %v1830
    %v1863 = vadd.f32 %v1440, %v1831
    %v1864 = vadd.f32 %v1441, %v1832
    %v1865 = vadd.f32 %v1442, %v1833
    %v1866 = vadd.f32 %v1443, %v1834
    %v1867 = vadd.f32 %v1444, %v1835
    %v1868 = vadd.f32 %v1445, %v1836
    %v1869 = vadd.f32 %v1446, %v1837
    %v1870 = vadd.f32 %v1447, %v1838
    %v1871 = vadd.f32 %v1448, %v1839
    %v1872 = vadd.f32 %v1449, %v1840
    %v1873 = vadd.f32 %v1450, %v1841
    %v1874 = vadd.f32 %v1451, %v1842
    %v1875 = vadd.f32 %v1452, %v1843
    %v1876 = vadd.f32 %v1453, %v1844
    %v1877 = vadd.f32 %v1454, %v1845
    %v1878 = vadd.f32 %v1455, %v1846
    %v1879 = vadd.f32 %v1456, %v1847
    %v1880 = vadd.f32 %v1457, %v1848
    %v1881 = vadd.f32 %v1458, %v1849
    %v1882 = vadd.f32 %v1459, %v1850
    %v1883 = vadd.f32 %v1460, %v1851
    %v1884 = vadd.f32 %v1461, %v1852
    %v1885 = vadd.f32 %v1462, %v1853
    %1886 = vst [vmem:[%s9] sm:$0xff] %v1854
    %vm1887 = vcmask 130048
    %1888 = vst.msk [vmem:[%s9 + $0x8] sm:$0xff] %vm1887, %v1855
    %1889 = vst [vmem:[%s9 + $0x10] sm:$0xff] %v1856
    %1890 = vst.msk [vmem:[%s9 + $0x18] sm:$0xff] %vm1887, %v1857
    %1891 = vst [vmem:[%s9 + $0x20] sm:$0xff] %v1858
    %1892 = vst.msk [vmem:[%s9 + $0x28] sm:$0xff] %vm1887, %v1859
    %1893 = vst [vmem:[%s9 + $0x30] sm:$0xff] %v1860
    %1894 = vst.msk [vmem:[%s9 + $0x38] sm:$0xff] %vm1887, %v1861
    %1895 = vst [vmem:[%s9 + $0x40] sm:$0xff] %v1862
    %1896 = vst.msk [vmem:[%s9 + $0x48] sm:$0xff] %vm1887, %v1863
    %1897 = vst [vmem:[%s9 + $0x50] sm:$0xff] %v1864
    %1898 = vst.msk [vmem:[%s9 + $0x58] sm:$0xff] %vm1887, %v1865
    %1899 = vst [vmem:[%s9 + $0x60] sm:$0xff] %v1866
    %1900 = vst.msk [vmem:[%s9 + $0x68] sm:$0xff] %vm1887, %v1867
    %1901 = vst [vmem:[%s9 + $0x70] sm:$0xff] %v1868
    %1902 = vst.msk [vmem:[%s9 + $0x78] sm:$0xff] %vm1887, %v1869
    %1903 = vst [vmem:[%s9 + $0x80] sm:$0xff] %v1870
    %1904 = vst.msk [vmem:[%s9 + $0x88] sm:$0xff] %vm1887, %v1871
    %1905 = vst [vmem:[%s9 + $0x90] sm:$0xff] %v1872
    %1906 = vst.msk [vmem:[%s9 + $0x98] sm:$0xff] %vm1887, %v1873
    %1907 = vst [vmem:[%s9 + $0xa0] sm:$0xff] %v1874
    %1908 = vst.msk [vmem:[%s9 + $0xa8] sm:$0xff] %vm1887, %v1875
    %1909 = vst [vmem:[%s9 + $0xb0] sm:$0xff] %v1876
    %1910 = vst.msk [vmem:[%s9 + $0xb8] sm:$0xff] %vm1887, %v1877
    %1911 = vst [vmem:[%s9 + $0xc0] sm:$0xff] %v1878
    %1912 = vst.msk [vmem:[%s9 + $0xc8] sm:$0xff] %vm1887, %v1879
    %1913 = vst [vmem:[%s9 + $0xd0] sm:$0xff] %v1880
    %1914 = vst.msk [vmem:[%s9 + $0xd8] sm:$0xff] %vm1887, %v1881
    %1915 = vst [vmem:[%s9 + $0xe0] sm:$0xff] %v1882
    %1916 = vst.msk [vmem:[%s9 + $0xe8] sm:$0xff] %vm1887, %v1883
    %1917 = vst [vmem:[%s9 + $0xf0] sm:$0xff] %v1884
    %1918 = vst.msk [vmem:[%s9 + $0xf8] sm:$0xff] %vm1887, %v1885
    // Predicated region
    $region42: #{tpu_custom_call.1} parent=1 // pred_check
      _
    $region43: #{tpu_custom_call.1} parent=1 // pred_check_branch
      %1920 = sbr.rel (0) target = $region45
    $region44: #{tpu_custom_call.1} parent=1 // pred_region
      _
    $region45: #{tpu_custom_call.1} parent=1 // pred_fallthru
      _
    // Predicated region
    $region46: #{tpu_custom_call.1} parent=1 // pred_check
      _
    $region47: #{tpu_custom_call.1} parent=1 // pred_check_branch
      %1922 = sbr.rel (0) target = $region49
    $region48: #{tpu_custom_call.1} parent=1 // pred_region
      _
    $region49: #{tpu_custom_call.1} parent=1 // pred_fallthru
      _
    %1923 = vsyncpa [#allocation3], 1

</llo_original>
